<compile_context>
chip_gen: v7x
topology: tpu7x:2x2x1
jax: 0.10.0
libtpu: 0.0.40
codegen_flags: <defaults>
</compile_context>

<pallas_src>
import functools

import jax
import jax.numpy as jnp
import numpy as np
from jax.experimental import pallas as pl

NEG_SLOPE = 0.2      # LeakyReLU slope used by GATConv
BN_EPS = 1e-5
MASK_VAL = -1e30     # additive mask value for non-edges (wrapper-side only)


# ------------------------------ fused Pallas kernel ------------------------------

def _gat_model_kernel(x_ref, adjb_ref, s1_ref, s2_ref, s3_ref, o_ref,
                      *, in_ch, hidden, heads, out_ch):
    """Fused gat1 -> bn1+relu -> gat2 -> bn2+relu -> gat3 -> relu (eval mode).

    Each s*_ref is a packed per-layer parameter slab (see _pack_layer):
      rows 0..K-1 : [ W | W @ A_dst_bd | W @ A_src_bd ]
      row  K      : per-column scale  (bias + eval-BN folded; ones for layer 3)
      row  K+1    : per-column shift
    adjb_ref is the additive attention mask: 0.0 on edges (incl. self-loops), -1e30 else.
    Precondition: every dst row has >= 1 edge (self-loops) so the softmax denominator
    is nonzero.
    """
    adj_bias = adjb_ref[...]                                  # [N, N]; shared by all layers

    def gat_layer(x_val, slab_ref, k_in, n_heads, c):
        hc = n_heads * c
        slab = slab_ref[...]
        w_full = slab[:k_in, :]                               # [K, hc + 2H]
        scale = slab[k_in:k_in + 1, :hc]                      # [1, hc]
        shift = slab[k_in + 1:k_in + 2, :hc]                  # [1, hc]

        # One MXU matmul produces x' AND both rank-1 attention projections.
        proj = jnp.dot(x_val, w_full, preferred_element_type=jnp.float32)  # [N, hc+2H]
        xp = proj[:, :hc]                                     # [N, hc]
        a_dst = proj[:, hc:hc + n_heads]                      # [N, H]  (a_dst . x'_i per head)
        a_src = proj[:, hc + n_heads:hc + 2 * n_heads]        # [N, H]  (a_src . x'_j per head)

        # Batched per-head scores: s[h, i, j] = a_dst[i, h] + a_src[j, h]
        s = a_dst.T[:, :, None] + a_src.T[:, None, :]         # [H, N, N]
        s = jnp.where(s > 0, s, NEG_SLOPE * s)                # LeakyReLU(0.2)
        s = s + adj_bias[None, :, :]                          # additive non-edge mask
        m = jnp.max(s, axis=-1, keepdims=True)
        e = jnp.exp(s - m)                                    # masked entries underflow to 0
        denom = jnp.sum(e, axis=-1, keepdims=True)
        attn = e * pl.reciprocal(denom, approx=True)          # EUP recip (approx, ~1e-3 rel)

        # Per-head aggregation; heads concatenated in-register (no scratch round-trip).
        parts = [jnp.dot(attn[h], xp[:, h * c:(h + 1) * c],
                         preferred_element_type=jnp.float32)
                 for h in range(n_heads)]
        agg = parts[0] if n_heads == 1 else jnp.concatenate(parts, axis=1)  # [N, hc]
        # folded (bias + eval BatchNorm) affine + ReLU
        return jnp.maximum(agg * scale + shift, 0.0)

    h = gat_layer(x_ref[...].astype(jnp.float32), s1_ref, in_ch, heads, hidden)
    h = gat_layer(h, s2_ref, heads * hidden, heads, hidden)
    o_ref[...] = gat_layer(h, s3_ref, heads * hidden, 1, out_ch)


# ----------------------------------- wrapper --------------------------------------

def _full_spec(shape):
    # whole-array block (block dims == array dims, so no (8,128) divisibility required)
    return pl.BlockSpec(shape, lambda: (0,) * len(shape))


def _pack_layer(w, a_src, a_dst, scale, shift):
    """Pack one GAT layer's parameters into a single slab.

    Layout ([K+2, H*c + 2H]):
      rows 0..K-1 : [ W | W @ A_dst_bd | W @ A_src_bd ]  (block-diagonal per-head fold)
      row  K      : scale   (cols 0..H*c-1)
      row  K+1    : shift   (cols 0..H*c-1)
    """
    k_in, hc = w.shape
    heads, c = a_src.shape
    w3 = w.reshape(k_in, heads, c)
    w_dst = jnp.einsum("khc,hc->kh", w3, a_dst)               # [K, H]
    w_src = jnp.einsum("khc,hc->kh", w3, a_src)               # [K, H]
    top = jnp.concatenate([w, w_dst, w_src], axis=1)          # [K, hc + 2H]
    bottom = jnp.zeros((2, hc + 2 * heads), jnp.float32)
    bottom = bottom.at[0, :hc].set(scale.reshape(-1))
    bottom = bottom.at[1, :hc].set(shift.reshape(-1))
    return jnp.concatenate([top, bottom], axis=0).astype(jnp.float32)


def gat_model_forward(x, adj, p, *, heads, hidden, out_channels):
    f32 = jnp.float32
    # Fold bias + eval-mode BatchNorm into a per-column affine: y = agg*scale + shift
    #   scale = gamma * rsqrt(var + eps),  shift = beta + (bias - mean) * scale
    sc1 = p["g1"] * jax.lax.rsqrt(p["v1"] + BN_EPS)
    sh1 = p["be1"] + (p["b1"] - p["m1"]) * sc1
    sc2 = p["g2"] * jax.lax.rsqrt(p["v2"] + BN_EPS)
    sh2 = p["be2"] + (p["b2"] - p["m2"]) * sc2

    slab1 = _pack_layer(p["w1"], p["as1"], p["ad1"], sc1, sh1)
    slab2 = _pack_layer(p["w2"], p["as2"], p["ad2"], sc2, sh2)
    slab3 = _pack_layer(p["w3"], p["as3"], p["ad3"],
                        jnp.ones((1, out_channels), f32), p["b3"])

    # Additive attention mask; requires every row to have >= 1 edge (self-loops).
    adj_bias = jnp.where(adj > 0, 0.0, MASK_VAL).astype(f32)

    n, in_ch = x.shape
    kernel = functools.partial(_gat_model_kernel, in_ch=in_ch, hidden=hidden,
                               heads=heads, out_ch=out_channels)
    args = (x.astype(f32), adj_bias, slab1, slab2, slab3)
    return pl.pallas_call(
        kernel,
        out_shape=jax.ShapeDtypeStruct((n, out_channels), f32),
        in_specs=[_full_spec(a.shape) for a in args],
        out_specs=_full_spec((n, out_channels)),
    )(*args)


# ------------------------------ pure-JAX reference --------------------------------

def _ref_gat(x, w, asrc, adst, bias, adj, heads, out_ch, apply_relu):
    xp = x @ w
    outs = []
    for h in range(heads):
        xh = xp[:, h * out_ch:(h + 1) * out_ch]
        a_dst = xh @ adst[h]
        a_src = xh @ asrc[h]
        s = a_dst[:, None] + a_src[None, :]
        s = jnp.where(s > 0, s, NEG_SLOPE * s)
        s = jnp.where(adj > 0, s, -1e30)
        attn = jax.nn.softmax(s, axis=1)
        outs.append(attn @ xh)
    out = jnp.concatenate(outs, axis=1) + bias
    return jnp.maximum(out, 0.0) if apply_relu else out


def _ref_bn_relu(x, g, b, m, v):
    return jnp.maximum((x - m) / jnp.sqrt(v + BN_EPS) * g + b, 0.0)


def _ref_forward(x, adj, p, heads, hidden, out_channels):
    h = _ref_gat(x, p["w1"], p["as1"], p["ad1"], p["b1"], adj, heads, hidden, False)
    h = _ref_bn_relu(h, p["g1"], p["be1"], p["m1"], p["v1"])
    h = _ref_gat(h, p["w2"], p["as2"], p["ad2"], p["b2"], adj, heads, hidden, False)
    h = _ref_bn_relu(h, p["g2"], p["be2"], p["m2"], p["v2"])
    return _ref_gat(h, p["w3"], p["as3"], p["ad3"], p["b3"], adj, 1, out_channels, True)


# ------------------------------------- main ----------------------------------------

if __name__ == "__main__":
    N = 16               # nodes (players)
    IN = 8               # len(selected_features)
    HIDDEN = 8           # hidden_channels
    HEADS = 2            # heads
    OUT = 4              # out_channels

    key = jax.random.PRNGKey(0)
    keys = jax.random.split(key, 24)
    ki = iter(keys)

    def nrm(shape, scale=0.1):
        return scale * jax.random.normal(next(ki), shape, dtype=jnp.float32)

    # node features
    x = jax.random.normal(next(ki), (N, IN), dtype=jnp.float32)

    # deterministic KNN-like edge_index [2, E] (src row 0, dst row 1) + self loops -> dense mask
    src = np.concatenate([np.arange(N), np.arange(N), (np.arange(N) + 1) % N, (np.arange(N) + 5) % N])
    dst = np.concatenate([(np.arange(N) + 1) % N, (np.arange(N) + 5) % N, np.arange(N), np.arange(N)])
    edge_index = jnp.asarray(np.stack([src, dst]), dtype=jnp.int32)
    adj = jnp.zeros((N, N), jnp.float32).at[edge_index[1], edge_index[0]].set(1.0)
    adj = jnp.maximum(adj, jnp.eye(N, dtype=jnp.float32))   # add self loops (GATConv default)

    params = {
        # GATConv 1: IN -> HIDDEN, HEADS heads (concat)
        "w1": nrm((IN, HEADS * HIDDEN)), "as1": nrm((HEADS, HIDDEN)),
        "ad1": nrm((HEADS, HIDDEN)), "b1": nrm((1, HEADS * HIDDEN)),
        # BatchNorm 1 (eval mode running stats)
        "g1": 1.0 + nrm((1, HEADS * HIDDEN)), "be1": nrm((1, HEADS * HIDDEN)),
        "m1": nrm((1, HEADS * HIDDEN)), "v1": 1.0 + jnp.abs(nrm((1, HEADS * HIDDEN))),
        # GATConv 2: HEADS*HIDDEN -> HIDDEN, HEADS heads
        "w2": nrm((HEADS * HIDDEN, HEADS * HIDDEN)), "as2": nrm((HEADS, HIDDEN)),
        "ad2": nrm((HEADS, HIDDEN)), "b2": nrm((1, HEADS * HIDDEN)),
        # BatchNorm 2
        "g2": 1.0 + nrm((1, HEADS * HIDDEN)), "be2": nrm((1, HEADS * HIDDEN)),
        "m2": nrm((1, HEADS * HIDDEN)), "v2": 1.0 + jnp.abs(nrm((1, HEADS * HIDDEN))),
        # GATConv 3: HEADS*HIDDEN -> OUT, 1 head
        "w3": nrm((HEADS * HIDDEN, OUT)), "as3": nrm((1, OUT)),
        "ad3": nrm((1, OUT)), "b3": nrm((1, OUT)),
    }

    out = gat_model_forward(x, adj, params, heads=HEADS, hidden=HIDDEN, out_channels=OUT)
    out = jax.block_until_ready(out)

    ref = _ref_forward(x, adj, params, HEADS, HIDDEN, OUT)
    assert out.shape == (N, OUT)
    # tolerance accounts for the EUP approximate reciprocal in the softmax normalization
    np.testing.assert_allclose(np.asarray(out), np.asarray(ref), rtol=2e-2, atol=2e-3)

    print("KERNEL_OK")
</pallas_src>

<mosaic_0001>
module attributes {stable_mosaic.version = 11 : i64} {
  func.func @_gat_model_kernel(%arg0: memref<16x8xf32, #tpu.memory_space<vmem>>, %arg1: memref<16x16xf32, #tpu.memory_space<vmem>>, %arg2: memref<10x20xf32, #tpu.memory_space<vmem>>, %arg3: memref<18x20xf32, #tpu.memory_space<vmem>>, %arg4: memref<18x6xf32, #tpu.memory_space<vmem>>, %arg5: memref<16x4xf32, #tpu.memory_space<vmem>>) attributes {dimension_semantics = [], scalar_prefetch = 0 : i64, scratch_operands = 0 : i64, tpu.core_type = #tpu.core_type<tc>} {
    %c0 = arith.constant 0 : index
    %c0_0 = arith.constant 0 : index
    %0 = vector.load %arg1[%c0, %c0_0] : memref<16x16xf32, #tpu.memory_space<vmem>>, vector<16x16xf32>
    %c0_1 = arith.constant 0 : index
    %c0_2 = arith.constant 0 : index
    %1 = vector.load %arg0[%c0_1, %c0_2] : memref<16x8xf32, #tpu.memory_space<vmem>>, vector<16x8xf32>
    %c0_3 = arith.constant 0 : index
    %c0_4 = arith.constant 0 : index
    %2 = vector.load %arg2[%c0_3, %c0_4] : memref<10x20xf32, #tpu.memory_space<vmem>>, vector<10x20xf32>
    %3 = vector.extract_strided_slice %2 {offsets = [0, 0], sizes = [8, 20], strides = [1, 1]} : vector<10x20xf32> to vector<8x20xf32>
    %4 = vector.extract_strided_slice %2 {offsets = [8, 0], sizes = [1, 16], strides = [1, 1]} : vector<10x20xf32> to vector<1x16xf32>
    %5 = vector.extract_strided_slice %2 {offsets = [9, 0], sizes = [1, 16], strides = [1, 1]} : vector<10x20xf32> to vector<1x16xf32>
    %cst = arith.constant dense<0.000000e+00> : vector<16x20xf32>
    %6 = tpu.matmul %1, %3, %cst {dimension_numbers = #tpu.dot_dimension_numbers<[1], [0], [0], [1], [0, 0, 1, 1], [], []>} : vector<16x8xf32>, vector<8x20xf32>, vector<16x20xf32> -> vector<16x20xf32>
    %7 = vector.extract_strided_slice %6 {offsets = [0, 0], sizes = [16, 16], strides = [1, 1]} : vector<16x20xf32> to vector<16x16xf32>
    %8 = vector.extract_strided_slice %6 {offsets = [0, 16], sizes = [16, 2], strides = [1, 1]} : vector<16x20xf32> to vector<16x2xf32>
    %9 = vector.extract_strided_slice %6 {offsets = [0, 18], sizes = [16, 2], strides = [1, 1]} : vector<16x20xf32> to vector<16x2xf32>
    %10 = tpu.transpose %8, [1, 0] : vector<16x2xf32> -> vector<2x16xf32>
    %11 = vector.shape_cast %10 : vector<2x16xf32> to vector<2x16x1xf32>
    %12 = tpu.transpose %9, [1, 0] : vector<16x2xf32> -> vector<2x16xf32>
    %13 = vector.shape_cast %12 : vector<2x16xf32> to vector<2x1x16xf32>
    %14 = vector.broadcast %11 : vector<2x16x1xf32> to vector<2x16x16xf32>
    %15 = vector.broadcast %13 : vector<2x1x16xf32> to vector<2x16x16xf32>
    %16 = arith.addf %14, %15 : vector<2x16x16xf32>
    %cst_5 = arith.constant 0.000000e+00 : f32
    %17 = vector.broadcast %cst_5 : f32 to vector<2x16x16xf32>
    %18 = arith.cmpf ogt, %16, %17 : vector<2x16x16xf32>
    %cst_6 = arith.constant 2.000000e-01 : f32
    %19 = vector.broadcast %cst_6 : f32 to vector<2x16x16xf32>
    %20 = arith.mulf %19, %16 : vector<2x16x16xf32>
    %21 = arith.select %18, %16, %20 : vector<2x16x16xi1>, vector<2x16x16xf32>
    %22 = vector.shape_cast %0 : vector<16x16xf32> to vector<1x16x16xf32>
    %23 = vector.broadcast %22 : vector<1x16x16xf32> to vector<2x16x16xf32>
    %24 = arith.addf %21, %23 : vector<2x16x16xf32>
    %cst_7 = arith.constant dense<0xFF800000> : vector<2x16xf32>
    %25 = vector.multi_reduction <maximumf>, %24, %cst_7 [2] : vector<2x16x16xf32> to vector<2x16xf32>
    %26 = vector.shape_cast %25 : vector<2x16xf32> to vector<2x16x1xf32>
    %27 = vector.broadcast %26 : vector<2x16x1xf32> to vector<2x16x16xf32>
    %28 = arith.subf %24, %27 : vector<2x16x16xf32>
    %29 = math.exp %28 : vector<2x16x16xf32>
    %cst_8 = arith.constant dense<0.000000e+00> : vector<2x16xf32>
    %30 = vector.multi_reduction <add>, %29, %cst_8 [2] : vector<2x16x16xf32> to vector<2x16xf32>
    %31 = vector.shape_cast %30 : vector<2x16xf32> to vector<2x16x1xf32>
    %32 = tpu.reciprocal %31 {approx = true} : vector<2x16x1xf32> -> vector<2x16x1xf32>
    %33 = vector.broadcast %32 : vector<2x16x1xf32> to vector<2x16x16xf32>
    %34 = arith.mulf %29, %33 : vector<2x16x16xf32>
    %35 = vector.extract_strided_slice %34 {offsets = [0, 0, 0], sizes = [1, 16, 16], strides = [1, 1, 1]} : vector<2x16x16xf32> to vector<1x16x16xf32>
    %36 = vector.shape_cast %35 : vector<1x16x16xf32> to vector<16x16xf32>
    %37 = vector.extract_strided_slice %7 {offsets = [0, 0], sizes = [16, 8], strides = [1, 1]} : vector<16x16xf32> to vector<16x8xf32>
    %cst_9 = arith.constant dense<0.000000e+00> : vector<16x8xf32>
    %38 = tpu.matmul %36, %37, %cst_9 {dimension_numbers = #tpu.dot_dimension_numbers<[1], [0], [0], [1], [0, 0, 1, 1], [], []>} : vector<16x16xf32>, vector<16x8xf32>, vector<16x8xf32> -> vector<16x8xf32>
    %39 = vector.extract_strided_slice %34 {offsets = [1, 0, 0], sizes = [1, 16, 16], strides = [1, 1, 1]} : vector<2x16x16xf32> to vector<1x16x16xf32>
    %40 = vector.shape_cast %39 : vector<1x16x16xf32> to vector<16x16xf32>
    %41 = vector.extract_strided_slice %7 {offsets = [0, 8], sizes = [16, 8], strides = [1, 1]} : vector<16x16xf32> to vector<16x8xf32>
    %cst_10 = arith.constant dense<0.000000e+00> : vector<16x8xf32>
    %42 = tpu.matmul %40, %41, %cst_10 {dimension_numbers = #tpu.dot_dimension_numbers<[1], [0], [0], [1], [0, 0, 1, 1], [], []>} : vector<16x16xf32>, vector<16x8xf32>, vector<16x8xf32> -> vector<16x8xf32>
    %43 = tpu.concatenate %38, %42 in 1 : vector<16x8xf32>, vector<16x8xf32> -> vector<16x16xf32>
    %44 = vector.broadcast %4 : vector<1x16xf32> to vector<16x16xf32>
    %45 = arith.mulf %43, %44 : vector<16x16xf32>
    %46 = vector.broadcast %5 : vector<1x16xf32> to vector<16x16xf32>
    %47 = arith.addf %45, %46 : vector<16x16xf32>
    %cst_11 = arith.constant 0.000000e+00 : f32
    %48 = vector.broadcast %cst_11 : f32 to vector<16x16xf32>
    %49 = arith.maximumf %47, %48 : vector<16x16xf32>
    %c0_12 = arith.constant 0 : index
    %c0_13 = arith.constant 0 : index
    %50 = vector.load %arg3[%c0_12, %c0_13] : memref<18x20xf32, #tpu.memory_space<vmem>>, vector<18x20xf32>
    %51 = vector.extract_strided_slice %50 {offsets = [0, 0], sizes = [16, 20], strides = [1, 1]} : vector<18x20xf32> to vector<16x20xf32>
    %52 = vector.extract_strided_slice %50 {offsets = [16, 0], sizes = [1, 16], strides = [1, 1]} : vector<18x20xf32> to vector<1x16xf32>
    %53 = vector.extract_strided_slice %50 {offsets = [17, 0], sizes = [1, 16], strides = [1, 1]} : vector<18x20xf32> to vector<1x16xf32>
    %cst_14 = arith.constant dense<0.000000e+00> : vector<16x20xf32>
    %54 = tpu.matmul %49, %51, %cst_14 {dimension_numbers = #tpu.dot_dimension_numbers<[1], [0], [0], [1], [0, 0, 1, 1], [], []>} : vector<16x16xf32>, vector<16x20xf32>, vector<16x20xf32> -> vector<16x20xf32>
    %55 = vector.extract_strided_slice %54 {offsets = [0, 0], sizes = [16, 16], strides = [1, 1]} : vector<16x20xf32> to vector<16x16xf32>
    %56 = vector.extract_strided_slice %54 {offsets = [0, 16], sizes = [16, 2], strides = [1, 1]} : vector<16x20xf32> to vector<16x2xf32>
    %57 = vector.extract_strided_slice %54 {offsets = [0, 18], sizes = [16, 2], strides = [1, 1]} : vector<16x20xf32> to vector<16x2xf32>
    %58 = tpu.transpose %56, [1, 0] : vector<16x2xf32> -> vector<2x16xf32>
    %59 = vector.shape_cast %58 : vector<2x16xf32> to vector<2x16x1xf32>
    %60 = tpu.transpose %57, [1, 0] : vector<16x2xf32> -> vector<2x16xf32>
    %61 = vector.shape_cast %60 : vector<2x16xf32> to vector<2x1x16xf32>
    %62 = vector.broadcast %59 : vector<2x16x1xf32> to vector<2x16x16xf32>
    %63 = vector.broadcast %61 : vector<2x1x16xf32> to vector<2x16x16xf32>
    %64 = arith.addf %62, %63 : vector<2x16x16xf32>
    %cst_15 = arith.constant 0.000000e+00 : f32
    %65 = vector.broadcast %cst_15 : f32 to vector<2x16x16xf32>
    %66 = arith.cmpf ogt, %64, %65 : vector<2x16x16xf32>
    %cst_16 = arith.constant 2.000000e-01 : f32
    %67 = vector.broadcast %cst_16 : f32 to vector<2x16x16xf32>
    %68 = arith.mulf %67, %64 : vector<2x16x16xf32>
    %69 = arith.select %66, %64, %68 : vector<2x16x16xi1>, vector<2x16x16xf32>
    %70 = vector.shape_cast %0 : vector<16x16xf32> to vector<1x16x16xf32>
    %71 = vector.broadcast %70 : vector<1x16x16xf32> to vector<2x16x16xf32>
    %72 = arith.addf %69, %71 : vector<2x16x16xf32>
    %cst_17 = arith.constant dense<0xFF800000> : vector<2x16xf32>
    %73 = vector.multi_reduction <maximumf>, %72, %cst_17 [2] : vector<2x16x16xf32> to vector<2x16xf32>
    %74 = vector.shape_cast %73 : vector<2x16xf32> to vector<2x16x1xf32>
    %75 = vector.broadcast %74 : vector<2x16x1xf32> to vector<2x16x16xf32>
    %76 = arith.subf %72, %75 : vector<2x16x16xf32>
    %77 = math.exp %76 : vector<2x16x16xf32>
    %cst_18 = arith.constant dense<0.000000e+00> : vector<2x16xf32>
    %78 = vector.multi_reduction <add>, %77, %cst_18 [2] : vector<2x16x16xf32> to vector<2x16xf32>
    %79 = vector.shape_cast %78 : vector<2x16xf32> to vector<2x16x1xf32>
    %80 = tpu.reciprocal %79 {approx = true} : vector<2x16x1xf32> -> vector<2x16x1xf32>
    %81 = vector.broadcast %80 : vector<2x16x1xf32> to vector<2x16x16xf32>
    %82 = arith.mulf %77, %81 : vector<2x16x16xf32>
    %83 = vector.extract_strided_slice %82 {offsets = [0, 0, 0], sizes = [1, 16, 16], strides = [1, 1, 1]} : vector<2x16x16xf32> to vector<1x16x16xf32>
    %84 = vector.shape_cast %83 : vector<1x16x16xf32> to vector<16x16xf32>
    %85 = vector.extract_strided_slice %55 {offsets = [0, 0], sizes = [16, 8], strides = [1, 1]} : vector<16x16xf32> to vector<16x8xf32>
    %cst_19 = arith.constant dense<0.000000e+00> : vector<16x8xf32>
    %86 = tpu.matmul %84, %85, %cst_19 {dimension_numbers = #tpu.dot_dimension_numbers<[1], [0], [0], [1], [0, 0, 1, 1], [], []>} : vector<16x16xf32>, vector<16x8xf32>, vector<16x8xf32> -> vector<16x8xf32>
    %87 = vector.extract_strided_slice %82 {offsets = [1, 0, 0], sizes = [1, 16, 16], strides = [1, 1, 1]} : vector<2x16x16xf32> to vector<1x16x16xf32>
    %88 = vector.shape_cast %87 : vector<1x16x16xf32> to vector<16x16xf32>
    %89 = vector.extract_strided_slice %55 {offsets = [0, 8], sizes = [16, 8], strides = [1, 1]} : vector<16x16xf32> to vector<16x8xf32>
    %cst_20 = arith.constant dense<0.000000e+00> : vector<16x8xf32>
    %90 = tpu.matmul %88, %89, %cst_20 {dimension_numbers = #tpu.dot_dimension_numbers<[1], [0], [0], [1], [0, 0, 1, 1], [], []>} : vector<16x16xf32>, vector<16x8xf32>, vector<16x8xf32> -> vector<16x8xf32>
    %91 = tpu.concatenate %86, %90 in 1 : vector<16x8xf32>, vector<16x8xf32> -> vector<16x16xf32>
    %92 = vector.broadcast %52 : vector<1x16xf32> to vector<16x16xf32>
    %93 = arith.mulf %91, %92 : vector<16x16xf32>
    %94 = vector.broadcast %53 : vector<1x16xf32> to vector<16x16xf32>
    %95 = arith.addf %93, %94 : vector<16x16xf32>
    %cst_21 = arith.constant 0.000000e+00 : f32
    %96 = vector.broadcast %cst_21 : f32 to vector<16x16xf32>
    %97 = arith.maximumf %95, %96 : vector<16x16xf32>
    %c0_22 = arith.constant 0 : index
    %c0_23 = arith.constant 0 : index
    %98 = vector.load %arg4[%c0_22, %c0_23] : memref<18x6xf32, #tpu.memory_space<vmem>>, vector<18x6xf32>
    %99 = vector.extract_strided_slice %98 {offsets = [0, 0], sizes = [16, 6], strides = [1, 1]} : vector<18x6xf32> to vector<16x6xf32>
    %100 = vector.extract_strided_slice %98 {offsets = [16, 0], sizes = [1, 4], strides = [1, 1]} : vector<18x6xf32> to vector<1x4xf32>
    %101 = vector.extract_strided_slice %98 {offsets = [17, 0], sizes = [1, 4], strides = [1, 1]} : vector<18x6xf32> to vector<1x4xf32>
    %cst_24 = arith.constant dense<0.000000e+00> : vector<16x6xf32>
    %102 = tpu.matmul %97, %99, %cst_24 {dimension_numbers = #tpu.dot_dimension_numbers<[1], [0], [0], [1], [0, 0, 1, 1], [], []>} : vector<16x16xf32>, vector<16x6xf32>, vector<16x6xf32> -> vector<16x6xf32>
    %103 = vector.extract_strided_slice %102 {offsets = [0, 0], sizes = [16, 4], strides = [1, 1]} : vector<16x6xf32> to vector<16x4xf32>
    %104 = vector.extract_strided_slice %102 {offsets = [0, 4], sizes = [16, 1], strides = [1, 1]} : vector<16x6xf32> to vector<16x1xf32>
    %105 = vector.extract_strided_slice %102 {offsets = [0, 5], sizes = [16, 1], strides = [1, 1]} : vector<16x6xf32> to vector<16x1xf32>
    %106 = tpu.transpose %104, [1, 0] : vector<16x1xf32> -> vector<1x16xf32>
    %107 = vector.shape_cast %106 : vector<1x16xf32> to vector<1x16x1xf32>
    %108 = tpu.transpose %105, [1, 0] : vector<16x1xf32> -> vector<1x16xf32>
    %109 = vector.shape_cast %108 : vector<1x16xf32> to vector<1x1x16xf32>
    %110 = vector.broadcast %107 : vector<1x16x1xf32> to vector<1x16x16xf32>
    %111 = vector.broadcast %109 : vector<1x1x16xf32> to vector<1x16x16xf32>
    %112 = arith.addf %110, %111 : vector<1x16x16xf32>
    %cst_25 = arith.constant 0.000000e+00 : f32
    %113 = vector.broadcast %cst_25 : f32 to vector<1x16x16xf32>
    %114 = arith.cmpf ogt, %112, %113 : vector<1x16x16xf32>
    %cst_26 = arith.constant 2.000000e-01 : f32
    %115 = vector.broadcast %cst_26 : f32 to vector<1x16x16xf32>
    %116 = arith.mulf %115, %112 : vector<1x16x16xf32>
    %117 = arith.select %114, %112, %116 : vector<1x16x16xi1>, vector<1x16x16xf32>
    %118 = vector.shape_cast %0 : vector<16x16xf32> to vector<1x16x16xf32>
    %119 = arith.addf %117, %118 : vector<1x16x16xf32>
    %cst_27 = arith.constant dense<0xFF800000> : vector<1x16xf32>
    %120 = vector.multi_reduction <maximumf>, %119, %cst_27 [2] : vector<1x16x16xf32> to vector<1x16xf32>
    %121 = vector.shape_cast %120 : vector<1x16xf32> to vector<1x16x1xf32>
    %122 = vector.broadcast %121 : vector<1x16x1xf32> to vector<1x16x16xf32>
    %123 = arith.subf %119, %122 : vector<1x16x16xf32>
    %124 = math.exp %123 : vector<1x16x16xf32>
    %cst_28 = arith.constant dense<0.000000e+00> : vector<1x16xf32>
    %125 = vector.multi_reduction <add>, %124, %cst_28 [2] : vector<1x16x16xf32> to vector<1x16xf32>
    %126 = vector.shape_cast %125 : vector<1x16xf32> to vector<1x16x1xf32>
    %127 = tpu.reciprocal %126 {approx = true} : vector<1x16x1xf32> -> vector<1x16x1xf32>
    %128 = vector.broadcast %127 : vector<1x16x1xf32> to vector<1x16x16xf32>
    %129 = arith.mulf %124, %128 : vector<1x16x16xf32>
    %130 = vector.shape_cast %129 : vector<1x16x16xf32> to vector<16x16xf32>
    %cst_29 = arith.constant dense<0.000000e+00> : vector<16x4xf32>
    %131 = tpu.matmul %130, %103, %cst_29 {dimension_numbers = #tpu.dot_dimension_numbers<[1], [0], [0], [1], [0, 0, 1, 1], [], []>} : vector<16x16xf32>, vector<16x4xf32>, vector<16x4xf32> -> vector<16x4xf32>
    %132 = vector.broadcast %100 : vector<1x4xf32> to vector<16x4xf32>
    %133 = arith.mulf %131, %132 : vector<16x4xf32>
    %134 = vector.broadcast %101 : vector<1x4xf32> to vector<16x4xf32>
    %135 = arith.addf %133, %134 : vector<16x4xf32>
    %cst_30 = arith.constant 0.000000e+00 : f32
    %136 = vector.broadcast %cst_30 : f32 to vector<16x4xf32>
    %137 = arith.maximumf %135, %136 : vector<16x4xf32>
    %c0_31 = arith.constant 0 : index
    %c0_32 = arith.constant 0 : index
    %138 = vector.load %arg5[%c0_31, %c0_32] : memref<16x4xf32, #tpu.memory_space<vmem>>, vector<16x4xf32>
    tpu.vector_store %arg5[%c0_31, %c0_32], %137 {strides = array<i32>} : memref<16x4xf32, #tpu.memory_space<vmem>>, vector<16x4xf32>,
    return
  }
}

</mosaic_0001>

<llo_original>
// kernel: tpu_custom_call.1
$region0: #{tpu_custom_call.1}
  #allocation0 [shape = 'u32[]', space=smem, size = 0x4, offset = 0x4, fixed_abs, tag = 'smem constant byte address 0x4 - core index']
  #allocation1 [shape = 'u32[144,128]{1,0:T(1,128)}', space=vmem, size = 0x12000, scoped, tag = 'internal scratch']
  %s0 = inlined_call_operand.vmem [shape: f32[16,8], index: 0, kind: input, shape index: {}]
  %s1 = inlined_call_operand.vmem [shape: f32[16,16], index: 1, kind: input, shape index: {}]
  %s2 = inlined_call_operand.vmem [shape: f32[10,20], index: 2, kind: input, shape index: {}]
  %s3 = inlined_call_operand.vmem [shape: f32[18,20], index: 3, kind: input, shape index: {}]
  %s4 = inlined_call_operand.vmem [shape: f32[18,6], index: 4, kind: input, shape index: {}]
  %s5 = inlined_call_operand.vmem [shape: f32[16,4], index: 5, kind: output, shape index: {}]
  %s6 = sld [smem:[#allocation0]]
  $region30: #{tpu_custom_call.1} parent=0
    _
  %s8 = ssub.s32 1, %s6
  %s9 = scalar_select 0, %s8, %s6
  // Predicated region
  $region2: #{tpu_custom_call.1} parent=0 // pred_check
    _
  $region3: #{tpu_custom_call.1} parent=0 // pred_check_branch
    %11 = sbr.rel (0) target = $region5
  $region4: #{tpu_custom_call.1} parent=0 // pred_region
    _
  $region5: #{tpu_custom_call.1} parent=0 // pred_fallthru
    _
  // Predicated region
  $region6: #{tpu_custom_call.1} parent=0 // pred_check
    _
  $region7: #{tpu_custom_call.1} parent=0 // pred_check_branch
    %13 = sbr.rel (0) target = $region9
  $region8: #{tpu_custom_call.1} parent=0 // pred_region
    _
  $region9: #{tpu_custom_call.1} parent=0 // pred_fallthru
    _
  // Predicated region
  $region10: #{tpu_custom_call.1} parent=0 // pred_check
    _
  $region11: #{tpu_custom_call.1} parent=0 // pred_check_branch
    %15 = sbr.rel (0) target = $region13
  $region12: #{tpu_custom_call.1} parent=0 // pred_region
    _
  $region13: #{tpu_custom_call.1} parent=0 // pred_fallthru
    _
  // Predicated region
  $region14: #{tpu_custom_call.1} parent=0 // pred_check
    _
  $region15: #{tpu_custom_call.1} parent=0 // pred_check_branch
    %17 = sbr.rel (0) target = $region17
  $region16: #{tpu_custom_call.1} parent=0 // pred_region
    _
  $region17: #{tpu_custom_call.1} parent=0 // pred_fallthru
    _
  // Predicated region
  $region18: #{tpu_custom_call.1} parent=0 // pred_check
    _
  $region19: #{tpu_custom_call.1} parent=0 // pred_check_branch
    %19 = sbr.rel (0) target = $region21
  $region20: #{tpu_custom_call.1} parent=0 // pred_region
    _
  $region21: #{tpu_custom_call.1} parent=0 // pred_fallthru
    _
  %v20 = vld [vmem:[%s1] sm:$0xff]
  %v21 = vld [vmem:[%s1 + $0x8] sm:$0xff]
  %v22 = vld [vmem:[%s0] sm:$0xff]
  %v23 = vld [vmem:[%s0 + $0x8] sm:$0xff]
  %v24 = vld [vmem:[%s2] sm:$0xff]
  %v25 = vld [vmem:[%s2 + $0x8] sm:$0x3]
  %vm26 = vcmask 64512
  %v28 = vsel %vm26, %v22, 0
  %v31 = vsel %vm26, %v23, 0
  %33 = vmatprep.subr.mxu0 0.0
  %34 = vmatpush1.msra.mxu0 %v24
  %35 = vmatprep.subr.mxu0 0.0
  %36 = vmatpush1.msra.mxu0 0.0
  %37 = vmatprep.subr.mxu0 0.0
  %38 = vmatpush1.msra.mxu0 0.0
  %39 = vmatprep.subr.mxu0 0.0
  %40 = vmatpush1.msra.mxu0 0.0
  %41 = vmatprep.subr.mxu0 0.0
  %42 = vmatpush1.msra.mxu0 0.0
  %43 = vmatprep.subr.mxu0 0.0
  %44 = vmatpush1.msra.mxu0 0.0
  %45 = vmatprep.subr.mxu0 0.0
  %46 = vmatpush1.msra.mxu0 0.0
  %47 = vmatprep.subr.mxu0 0.0
  %48 = vmatpush1.msra.mxu0 0.0
  %49 = vmatprep.subr.mxu0 0.0
  %50 = vmatpush1.msra.mxu0 0.0
  %51 = vmatprep.subr.mxu0 0.0
  %52 = vmatpush1.msra.mxu0 0.0
  %53 = vmatprep.subr.mxu0 0.0
  %54 = vmatpush1.msra.mxu0 0.0
  %55 = vmatprep.subr.mxu0 0.0
  %56 = vmatpush1.msra.mxu0 0.0
  %57 = vmatprep.subr.mxu0 0.0
  %58 = vmatpush1.msra.mxu0 0.0
  %59 = vmatprep.subr.mxu0 0.0
  %60 = vmatpush1.msra.mxu0 0.0
  %61 = vmatprep.subr.mxu0 0.0
  %62 = vmatpush1.msra.mxu0 0.0
  %63 = vmatprep.subr.mxu0 0.0
  %64 = vmatpush1.msra.mxu0 0.0
  %65 = vmatprep.subr.mxu0 0.0
  %66 = vmatpush1.msra.mxu0 0.0
  %67 = vmatprep.subr.mxu0 0.0
  %68 = vmatpush1.msra.mxu0 0.0
  %69 = vmatprep.subr.mxu0 0.0
  %70 = vmatpush1.msra.mxu0 0.0
  %71 = vmatprep.subr.mxu0 0.0
  %72 = vmatpush1.msra.mxu0 0.0
  %73 = vmatprep.subr.mxu0 0.0
  %74 = vmatpush1.msra.mxu0 0.0
  %75 = vmatprep.subr.mxu0 0.0
  %76 = vmatpush1.msra.mxu0 0.0
  %77 = vmatprep.subr.mxu0 0.0
  %78 = vmatpush1.msra.mxu0 0.0
  %79 = vmatprep.subr.mxu0 0.0
  %80 = vmatpush1.msra.mxu0 0.0
  %81 = vmatprep.subr.mxu0 0.0
  %82 = vmatpush1.msra.mxu0 0.0
  %83 = vmatprep.subr.mxu0 0.0
  %84 = vmatpush1.msra.mxu0 0.0
  %85 = vmatprep.subr.mxu0 0.0
  %86 = vmatpush1.msra.mxu0 0.0
  %87 = vmatprep.subr.mxu0 0.0
  %88 = vmatpush1.msra.mxu0 0.0
  %89 = vmatprep.subr.mxu0 0.0
  %90 = vmatpush1.msra.mxu0 0.0
  %91 = vmatprep.subr.mxu0 0.0
  %92 = vmatpush1.msra.mxu0 0.0
  %93 = vmatprep.subr.mxu0 0.0
  %94 = vmatpush1.msra.mxu0 0.0
  %95 = vmatprep.subr.mxu0 0.0
  %96 = vmatpush1.msra.mxu0 0.0
  %97 = vmatprep.mubr.f32.mxu0 0.0
  %98 = vmatmul.mubr.f32.gmra.mrb[0].mxu0 %v28
  %v99 = vpop.f32.mrb[0].mxu0
  %v100 = vadd.f32 0.0, %v99
  %v101 = vpop.f32.mrb[0].mxu0
  %102 = vmatprep.mubr.f32.mxu0 0.0
  %103 = vmatmul.mubr.f32.gmra.mrb[0].mxu0 %v31
  %v104 = vpop.f32.mrb[0].mxu0
  %v105 = vadd.f32 0.0, %v104
  %v106 = vpop.f32.mrb[0].mxu0
  %107 = vdwg.mxu0
  %110 = vrot.lane.b32.xlu0 %v100, 112
  %v111 = vpop.permute.xlu0 %110
  %112 = vrot.lane.b32.xlu0 %v105, 112
  %v113 = vpop.permute.xlu0 %112
  %116 = vxpose.xlu0.b32.start [1/16] %v111, 128
  %117 = vxpose.xlu0.b32.cont [2/16] %v113, 128
  %118 = vxpose.xlu0.b32.cont [3/16] 0.0, 128
  %119 = vxpose.xlu0.b32.cont [4/16] 0.0, 128
  %120 = vxpose.xlu0.b32.cont [5/16] 0.0, 128
  %121 = vxpose.xlu0.b32.cont [6/16] 0.0, 128
  %122 = vxpose.xlu0.b32.cont [7/16] 0.0, 128
  %123 = vxpose.xlu0.b32.cont [8/16] 0.0, 128
  %124 = vxpose.xlu0.b32.cont [9/16] 0.0, 128
  %125 = vxpose.xlu0.b32.cont [10/16] 0.0, 128
  %126 = vxpose.xlu0.b32.cont [11/16] 0.0, 128
  %127 = vxpose.xlu0.b32.cont [12/16] 0.0, 128
  %128 = vxpose.xlu0.b32.cont [13/16] 0.0, 128
  %129 = vxpose.xlu0.b32.cont [14/16] 0.0, 128
  %130 = vxpose.xlu0.b32.cont [15/16] 0.0, 128
  %131 = vxpose.xlu0.b32.end [16/16] 0.0, 128
  %v132 = vpop.trf.xlu0
  %v133 = vpop.trf.xlu0
  %v134 = vpop.trf.xlu0
  %v135 = vpop.trf.xlu0
  %v136 = vpop.trf.xlu0
  %v137 = vpop.trf.xlu0
  %v138 = vpop.trf.xlu0
  %v139 = vpop.trf.xlu0
  %v140 = vpop.trf.xlu0
  %v141 = vpop.trf.xlu0
  %v142 = vpop.trf.xlu0
  %v143 = vpop.trf.xlu0
  %v144 = vpop.trf.xlu0
  %v145 = vpop.trf.xlu0
  %v146 = vpop.trf.xlu0
  %v147 = vpop.trf.xlu0
  %v148 = vlaneseq
  %v149 = vshrl.u32 %v148, 7
  %v150 = vsub.s32 0, %v149
  %v151 = vrot.slane %v132, %v150
  %153 = vbcast.lane.b32.xlu0 %v151, 256
  %v154 = vpop.permute.xlu0 %153
  %s156 = sor.u32 256, 8
  %157 = vbcast.lane.b32.xlu0 %v151, %s156
  %v158 = vpop.permute.xlu0 %157
  %v159 = vlaneseq
  %v160 = vshrl.u32 %v159, 7
  %v161 = vsub.s32 1, %v160
  %v162 = vrot.slane %v132, %v161
  %164 = vbcast.lane.b32.xlu0 %v162, 256
  %v165 = vpop.permute.xlu0 %164
  %s167 = sor.u32 256, 8
  %168 = vbcast.lane.b32.xlu0 %v162, %s167
  %v169 = vpop.permute.xlu0 %168
  %170 = vrot.lane.b32.xlu0 %v100, 110
  %v171 = vpop.permute.xlu0 %170
  %172 = vrot.lane.b32.xlu0 %v105, 110
  %v173 = vpop.permute.xlu0 %172
  %176 = vxpose.xlu0.b32.start [1/16] %v171, 128
  %177 = vxpose.xlu0.b32.cont [2/16] %v173, 128
  %178 = vxpose.xlu0.b32.cont [3/16] 0.0, 128
  %179 = vxpose.xlu0.b32.cont [4/16] 0.0, 128
  %180 = vxpose.xlu0.b32.cont [5/16] 0.0, 128
  %181 = vxpose.xlu0.b32.cont [6/16] 0.0, 128
  %182 = vxpose.xlu0.b32.cont [7/16] 0.0, 128
  %183 = vxpose.xlu0.b32.cont [8/16] 0.0, 128
  %184 = vxpose.xlu0.b32.cont [9/16] 0.0, 128
  %185 = vxpose.xlu0.b32.cont [10/16] 0.0, 128
  %186 = vxpose.xlu0.b32.cont [11/16] 0.0, 128
  %187 = vxpose.xlu0.b32.cont [12/16] 0.0, 128
  %188 = vxpose.xlu0.b32.cont [13/16] 0.0, 128
  %189 = vxpose.xlu0.b32.cont [14/16] 0.0, 128
  %190 = vxpose.xlu0.b32.cont [15/16] 0.0, 128
  %191 = vxpose.xlu0.b32.end [16/16] 0.0, 128
  %v192 = vpop.trf.xlu0
  %v193 = vpop.trf.xlu0
  %v194 = vpop.trf.xlu0
  %v195 = vpop.trf.xlu0
  %v196 = vpop.trf.xlu0
  %v197 = vpop.trf.xlu0
  %v198 = vpop.trf.xlu0
  %v199 = vpop.trf.xlu0
  %v200 = vpop.trf.xlu0
  %v201 = vpop.trf.xlu0
  %v202 = vpop.trf.xlu0
  %v203 = vpop.trf.xlu0
  %v204 = vpop.trf.xlu0
  %v205 = vpop.trf.xlu0
  %v206 = vpop.trf.xlu0
  %v207 = vpop.trf.xlu0
  %v210 = vunpack.c.l.s4 1966171168
  %v211 = vunpack.c.0.s8 %v210
  %v212 = vlaneseq
  %v213 = vshrl.u32 %v212, 7
  %v214 = vsub.s32 %v211, %v213
  %v215 = vrot.slane %v192, %v214
  %v216 = vcombine.high %v215, %v215
  %v218 = vunpack.c.l.s4 1966171168
  %v219 = vunpack.c.0.s8 %v218
  %v220 = vlaneseq
  %v221 = vshrl.u32 %v220, 7
  %v222 = vsub.s32 %v219, %v221
  %v223 = vrot.slane %v215, %v222
  %v225 = vunpack.c.l.s4 1966171168
  %v226 = vunpack.c.0.s8 %v225
  %v227 = vlaneseq
  %v228 = vshrl.u32 %v227, 7
  %v229 = vsub.s32 %v226, %v228
  %v230 = vrot.slane %v216, %v229
  %v231 = vlaneseq
  %v232 = vshrl.u32 %v231, 7
  %v233 = vsub.s32 0, %v232
  %v234 = vrot.slane %v223, %v233
  %v235 = vlaneseq
  %v236 = vshrl.u32 %v235, 7
  %v237 = vsub.s32 0, %v236
  %v238 = vrot.slane %v230, %v237
  %v241 = vadd.f32 %v154, %v234
  %v242 = vadd.f32 %v158, %v234
  %v243 = vadd.f32 %v165, %v238
  %v244 = vadd.f32 %v169, %v238
  %vm245 = vcmp.gt.f32.partialorder %v241, 0.0
  %vm246 = vcmp.gt.f32.partialorder %v242, 0.0
  %vm247 = vcmp.gt.f32.partialorder %v243, 0.0
  %vm248 = vcmp.gt.f32.partialorder %v244, 0.0
  %v249 = vmul.f32 %v241, 0.2
  %v250 = vmul.f32 %v242, 0.2
  %v251 = vmul.f32 %v243, 0.2
  %v252 = vmul.f32 %v244, 0.2
  %v253 = vsel %vm245, %v241, %v249
  %v254 = vsel %vm246, %v242, %v250
  %v255 = vsel %vm247, %v243, %v251
  %v256 = vsel %vm248, %v244, %v252
  %v257 = vadd.f32 %v253, %v20
  %v258 = vadd.f32 %v254, %v21
  %v259 = vadd.f32 %v255, %v20
  %v260 = vadd.f32 %v256, %v21
  %vm261 = vcmask 130048
  %v262 = vsel %vm261, %v257, -inf
  %263 = vmax.xlane.f32.xlu0 %v262
  %v264 = vpop.xlane.xlu0 %263
  %v265 = vsel %vm261, %v258, -inf
  %266 = vmax.xlane.f32.xlu0 %v265
  %v267 = vpop.xlane.xlu0 %266
  %v268 = vsel %vm261, %v259, -inf
  %269 = vmax.xlane.f32.xlu0 %v268
  %v270 = vpop.xlane.xlu0 %269
  %v271 = vsel %vm261, %v260, -inf
  %272 = vmax.xlane.f32.xlu0 %v271
  %v273 = vpop.xlane.xlu0 %272
  %v274 = vsub.f32 %v257, %v264
  %v275 = vsub.f32 %v258, %v267
  %v276 = vsub.f32 %v259, %v270
  %v277 = vsub.f32 %v260, %v273
  %v278 = vmul.f32 %v274, 1.442695
  %v279 = vpow.pop %v278
  %v280 = vmul.f32 %v275, 1.442695
  %v281 = vpow.pop %v280
  %v282 = vmul.f32 %v276, 1.442695
  %v283 = vpow.pop %v282
  %v284 = vmul.f32 %v277, 1.442695
  %v285 = vpow.pop %v284
  %v286 = vsel %vm261, %v279, 0.0
  %287 = vadd.xlane.f32.xlu0 %v286
  %v288 = vpop.xlane.xlu0 %287
  %v289 = vsel %vm261, %v281, 0.0
  %290 = vadd.xlane.f32.xlu0 %v289
  %v291 = vpop.xlane.xlu0 %290
  %v292 = vsel %vm261, %v283, 0.0
  %293 = vadd.xlane.f32.xlu0 %v292
  %v294 = vpop.xlane.xlu0 %293
  %v295 = vsel %vm261, %v285, 0.0
  %296 = vadd.xlane.f32.xlu0 %v295
  %v297 = vpop.xlane.xlu0 %296
  %v298 = vrcp.pop %v288
  %v299 = vrcp.pop %v291
  %v300 = vrcp.pop %v294
  %v301 = vrcp.pop %v297
  %v302 = vmul.f32 %v279, %v298
  %v303 = vmul.f32 %v281, %v299
  %v304 = vmul.f32 %v283, %v300
  %v305 = vmul.f32 %v285, %v301
  %v307 = vsel %vm261, %v302, 0
  %v310 = vsel %vm261, %v303, 0
  %312 = vmatprep.subr.mxu0 0.0
  %313 = vmatpush1.msra.mxu0 %v100
  %314 = vmatprep.subr.mxu0 0.0
  %315 = vmatpush1.msra.mxu0 %v105
  %316 = vmatprep.subr.mxu0 0.0
  %317 = vmatpush1.msra.mxu0 0.0
  %318 = vmatprep.subr.mxu0 0.0
  %319 = vmatpush1.msra.mxu0 0.0
  %320 = vmatprep.subr.mxu0 0.0
  %321 = vmatpush1.msra.mxu0 0.0
  %322 = vmatprep.subr.mxu0 0.0
  %323 = vmatpush1.msra.mxu0 0.0
  %324 = vmatprep.subr.mxu0 0.0
  %325 = vmatpush1.msra.mxu0 0.0
  %326 = vmatprep.subr.mxu0 0.0
  %327 = vmatpush1.msra.mxu0 0.0
  %328 = vmatprep.subr.mxu0 0.0
  %329 = vmatpush1.msra.mxu0 0.0
  %330 = vmatprep.subr.mxu0 0.0
  %331 = vmatpush1.msra.mxu0 0.0
  %332 = vmatprep.subr.mxu0 0.0
  %333 = vmatpush1.msra.mxu0 0.0
  %334 = vmatprep.subr.mxu0 0.0
  %335 = vmatpush1.msra.mxu0 0.0
  %336 = vmatprep.subr.mxu0 0.0
  %337 = vmatpush1.msra.mxu0 0.0
  %338 = vmatprep.subr.mxu0 0.0
  %339 = vmatpush1.msra.mxu0 0.0
  %340 = vmatprep.subr.mxu0 0.0
  %341 = vmatpush1.msra.mxu0 0.0
  %342 = vmatprep.subr.mxu0 0.0
  %343 = vmatpush1.msra.mxu0 0.0
  %344 = vmatprep.subr.mxu0 0.0
  %345 = vmatpush1.msra.mxu0 0.0
  %346 = vmatprep.subr.mxu0 0.0
  %347 = vmatpush1.msra.mxu0 0.0
  %348 = vmatprep.subr.mxu0 0.0
  %349 = vmatpush1.msra.mxu0 0.0
  %350 = vmatprep.subr.mxu0 0.0
  %351 = vmatpush1.msra.mxu0 0.0
  %352 = vmatprep.subr.mxu0 0.0
  %353 = vmatpush1.msra.mxu0 0.0
  %354 = vmatprep.subr.mxu0 0.0
  %355 = vmatpush1.msra.mxu0 0.0
  %356 = vmatprep.subr.mxu0 0.0
  %357 = vmatpush1.msra.mxu0 0.0
  %358 = vmatprep.subr.mxu0 0.0
  %359 = vmatpush1.msra.mxu0 0.0
  %360 = vmatprep.subr.mxu0 0.0
  %361 = vmatpush1.msra.mxu0 0.0
  %362 = vmatprep.subr.mxu0 0.0
  %363 = vmatpush1.msra.mxu0 0.0
  %364 = vmatprep.subr.mxu0 0.0
  %365 = vmatpush1.msra.mxu0 0.0
  %366 = vmatprep.subr.mxu0 0.0
  %367 = vmatpush1.msra.mxu0 0.0
  %368 = vmatprep.subr.mxu0 0.0
  %369 = vmatpush1.msra.mxu0 0.0
  %370 = vmatprep.subr.mxu0 0.0
  %371 = vmatpush1.msra.mxu0 0.0
  %372 = vmatprep.subr.mxu0 0.0
  %373 = vmatpush1.msra.mxu0 0.0
  %374 = vmatprep.subr.mxu0 0.0
  %375 = vmatpush1.msra.mxu0 0.0
  %376 = vmatprep.mubr.f32.mxu0 0.0
  %377 = vmatmul.mubr.f32.gmra.mrb[0].mxu0 %v307
  %v378 = vpop.f32.mrb[0].mxu0
  %v379 = vadd.f32 0.0, %v378
  %v380 = vpop.f32.mrb[0].mxu0
  %381 = vmatprep.mubr.f32.mxu0 0.0
  %382 = vmatmul.mubr.f32.gmra.mrb[0].mxu0 %v310
  %v383 = vpop.f32.mrb[0].mxu0
  %v384 = vadd.f32 0.0, %v383
  %v385 = vpop.f32.mrb[0].mxu0
  %386 = vdwg.mxu0
  %387 = vrot.lane.b32.xlu0 %v100, 120
  %v388 = vpop.permute.xlu0 %387
  %389 = vrot.lane.b32.xlu0 %v105, 120
  %v390 = vpop.permute.xlu0 %389
  %v394 = vsel %vm261, %v304, 0
  %v397 = vsel %vm261, %v305, 0
  %399 = vmatprep.subr.mxu0 0.0
  %400 = vmatpush1.msra.mxu0 %v388
  %401 = vmatprep.subr.mxu0 0.0
  %402 = vmatpush1.msra.mxu0 %v390
  %403 = vmatprep.subr.mxu0 0.0
  %404 = vmatpush1.msra.mxu0 0.0
  %405 = vmatprep.subr.mxu0 0.0
  %406 = vmatpush1.msra.mxu0 0.0
  %407 = vmatprep.subr.mxu0 0.0
  %408 = vmatpush1.msra.mxu0 0.0
  %409 = vmatprep.subr.mxu0 0.0
  %410 = vmatpush1.msra.mxu0 0.0
  %411 = vmatprep.subr.mxu0 0.0
  %412 = vmatpush1.msra.mxu0 0.0
  %413 = vmatprep.subr.mxu0 0.0
  %414 = vmatpush1.msra.mxu0 0.0
  %415 = vmatprep.subr.mxu0 0.0
  %416 = vmatpush1.msra.mxu0 0.0
  %417 = vmatprep.subr.mxu0 0.0
  %418 = vmatpush1.msra.mxu0 0.0
  %419 = vmatprep.subr.mxu0 0.0
  %420 = vmatpush1.msra.mxu0 0.0
  %421 = vmatprep.subr.mxu0 0.0
  %422 = vmatpush1.msra.mxu0 0.0
  %423 = vmatprep.subr.mxu0 0.0
  %424 = vmatpush1.msra.mxu0 0.0
  %425 = vmatprep.subr.mxu0 0.0
  %426 = vmatpush1.msra.mxu0 0.0
  %427 = vmatprep.subr.mxu0 0.0
  %428 = vmatpush1.msra.mxu0 0.0
  %429 = vmatprep.subr.mxu0 0.0
  %430 = vmatpush1.msra.mxu0 0.0
  %431 = vmatprep.subr.mxu0 0.0
  %432 = vmatpush1.msra.mxu0 0.0
  %433 = vmatprep.subr.mxu0 0.0
  %434 = vmatpush1.msra.mxu0 0.0
  %435 = vmatprep.subr.mxu0 0.0
  %436 = vmatpush1.msra.mxu0 0.0
  %437 = vmatprep.subr.mxu0 0.0
  %438 = vmatpush1.msra.mxu0 0.0
  %439 = vmatprep.subr.mxu0 0.0
  %440 = vmatpush1.msra.mxu0 0.0
  %441 = vmatprep.subr.mxu0 0.0
  %442 = vmatpush1.msra.mxu0 0.0
  %443 = vmatprep.subr.mxu0 0.0
  %444 = vmatpush1.msra.mxu0 0.0
  %445 = vmatprep.subr.mxu0 0.0
  %446 = vmatpush1.msra.mxu0 0.0
  %447 = vmatprep.subr.mxu0 0.0
  %448 = vmatpush1.msra.mxu0 0.0
  %449 = vmatprep.subr.mxu0 0.0
  %450 = vmatpush1.msra.mxu0 0.0
  %451 = vmatprep.subr.mxu0 0.0
  %452 = vmatpush1.msra.mxu0 0.0
  %453 = vmatprep.subr.mxu0 0.0
  %454 = vmatpush1.msra.mxu0 0.0
  %455 = vmatprep.subr.mxu0 0.0
  %456 = vmatpush1.msra.mxu0 0.0
  %457 = vmatprep.subr.mxu0 0.0
  %458 = vmatpush1.msra.mxu0 0.0
  %459 = vmatprep.subr.mxu0 0.0
  %460 = vmatpush1.msra.mxu0 0.0
  %461 = vmatprep.subr.mxu0 0.0
  %462 = vmatpush1.msra.mxu0 0.0
  %463 = vmatprep.mubr.f32.mxu0 0.0
  %464 = vmatmul.mubr.f32.gmra.mrb[0].mxu0 %v394
  %v465 = vpop.f32.mrb[0].mxu0
  %v466 = vadd.f32 0.0, %v465
  %v467 = vpop.f32.mrb[0].mxu0
  %468 = vmatprep.mubr.f32.mxu0 0.0
  %469 = vmatmul.mubr.f32.gmra.mrb[0].mxu0 %v397
  %v470 = vpop.f32.mrb[0].mxu0
  %v471 = vadd.f32 0.0, %v470
  %v472 = vpop.f32.mrb[0].mxu0
  %473 = vdwg.mxu0
  %476 = vrot.lane.b32.xlu0 %v466, 8
  %v477 = vpop.permute.xlu0 %476
  %478 = vrot.lane.b32.xlu0 %v471, 8
  %v479 = vpop.permute.xlu0 %478
  %v482 = vsel %vm26, %v379, %v477
  %v483 = vsel %vm26, %v384, %v479
  %v484 = vlaneseq
  %v485 = vshrl.u32 %v484, 7
  %v486 = vsub.s32 0, %v485
  %v487 = vrot.slane %v25, %v486
  %v488 = vmul.f32 %v482, %v487
  %v489 = vmul.f32 %v483, %v487
  %v490 = vlaneseq
  %v491 = vshrl.u32 %v490, 7
  %v492 = vsub.s32 1, %v491
  %v493 = vrot.slane %v25, %v492
  %v494 = vadd.f32 %v488, %v493
  %v495 = vadd.f32 %v489, %v493
  %v496 = vmax.f32 %v494, 0.0
  %v497 = vmax.f32 %v495, 0.0
  %v498 = vld [vmem:[%s3] sm:$0xff]
  %v499 = vld [vmem:[%s3 + $0x8] sm:$0xff]
  %v500 = vld [vmem:[%s3 + $0x10] sm:$0x3]
  %v502 = vsel %vm261, %v496, 0
  %v505 = vsel %vm261, %v497, 0
  %507 = vmatprep.subr.mxu0 0.0
  %508 = vmatpush1.msra.mxu0 %v498
  %509 = vmatprep.subr.mxu0 0.0
  %510 = vmatpush1.msra.mxu0 %v499
  %511 = vmatprep.subr.mxu0 0.0
  %512 = vmatpush1.msra.mxu0 0.0
  %513 = vmatprep.subr.mxu0 0.0
  %514 = vmatpush1.msra.mxu0 0.0
  %515 = vmatprep.subr.mxu0 0.0
  %516 = vmatpush1.msra.mxu0 0.0
  %517 = vmatprep.subr.mxu0 0.0
  %518 = vmatpush1.msra.mxu0 0.0
  %519 = vmatprep.subr.mxu0 0.0
  %520 = vmatpush1.msra.mxu0 0.0
  %521 = vmatprep.subr.mxu0 0.0
  %522 = vmatpush1.msra.mxu0 0.0
  %523 = vmatprep.subr.mxu0 0.0
  %524 = vmatpush1.msra.mxu0 0.0
  %525 = vmatprep.subr.mxu0 0.0
  %526 = vmatpush1.msra.mxu0 0.0
  %527 = vmatprep.subr.mxu0 0.0
  %528 = vmatpush1.msra.mxu0 0.0
  %529 = vmatprep.subr.mxu0 0.0
  %530 = vmatpush1.msra.mxu0 0.0
  %531 = vmatprep.subr.mxu0 0.0
  %532 = vmatpush1.msra.mxu0 0.0
  %533 = vmatprep.subr.mxu0 0.0
  %534 = vmatpush1.msra.mxu0 0.0
  %535 = vmatprep.subr.mxu0 0.0
  %536 = vmatpush1.msra.mxu0 0.0
  %537 = vmatprep.subr.mxu0 0.0
  %538 = vmatpush1.msra.mxu0 0.0
  %539 = vmatprep.subr.mxu0 0.0
  %540 = vmatpush1.msra.mxu0 0.0
  %541 = vmatprep.subr.mxu0 0.0
  %542 = vmatpush1.msra.mxu0 0.0
  %543 = vmatprep.subr.mxu0 0.0
  %544 = vmatpush1.msra.mxu0 0.0
  %545 = vmatprep.subr.mxu0 0.0
  %546 = vmatpush1.msra.mxu0 0.0
  %547 = vmatprep.subr.mxu0 0.0
  %548 = vmatpush1.msra.mxu0 0.0
  %549 = vmatprep.subr.mxu0 0.0
  %550 = vmatpush1.msra.mxu0 0.0
  %551 = vmatprep.subr.mxu0 0.0
  %552 = vmatpush1.msra.mxu0 0.0
  %553 = vmatprep.subr.mxu0 0.0
  %554 = vmatpush1.msra.mxu0 0.0
  %555 = vmatprep.subr.mxu0 0.0
  %556 = vmatpush1.msra.mxu0 0.0
  %557 = vmatprep.subr.mxu0 0.0
  %558 = vmatpush1.msra.mxu0 0.0
  %559 = vmatprep.subr.mxu0 0.0
  %560 = vmatpush1.msra.mxu0 0.0
  %561 = vmatprep.subr.mxu0 0.0
  %562 = vmatpush1.msra.mxu0 0.0
  %563 = vmatprep.subr.mxu0 0.0
  %564 = vmatpush1.msra.mxu0 0.0
  %565 = vmatprep.subr.mxu0 0.0
  %566 = vmatpush1.msra.mxu0 0.0
  %567 = vmatprep.subr.mxu0 0.0
  %568 = vmatpush1.msra.mxu0 0.0
  %569 = vmatprep.subr.mxu0 0.0
  %570 = vmatpush1.msra.mxu0 0.0
  %571 = vmatprep.mubr.f32.mxu0 0.0
  %572 = vmatmul.mubr.f32.gmra.mrb[0].mxu0 %v502
  %v573 = vpop.f32.mrb[0].mxu0
  %v574 = vadd.f32 0.0, %v573
  %v575 = vpop.f32.mrb[0].mxu0
  %576 = vmatprep.mubr.f32.mxu0 0.0
  %577 = vmatmul.mubr.f32.gmra.mrb[0].mxu0 %v505
  %v578 = vpop.f32.mrb[0].mxu0
  %v579 = vadd.f32 0.0, %v578
  %v580 = vpop.f32.mrb[0].mxu0
  %581 = vdwg.mxu0
  %584 = vrot.lane.b32.xlu0 %v574, 112
  %v585 = vpop.permute.xlu0 %584
  %586 = vrot.lane.b32.xlu0 %v579, 112
  %v587 = vpop.permute.xlu0 %586
  %590 = vxpose.xlu0.b32.start [1/16] %v585, 128
  %591 = vxpose.xlu0.b32.cont [2/16] %v587, 128
  %592 = vxpose.xlu0.b32.cont [3/16] 0.0, 128
  %593 = vxpose.xlu0.b32.cont [4/16] 0.0, 128
  %594 = vxpose.xlu0.b32.cont [5/16] 0.0, 128
  %595 = vxpose.xlu0.b32.cont [6/16] 0.0, 128
  %596 = vxpose.xlu0.b32.cont [7/16] 0.0, 128
  %597 = vxpose.xlu0.b32.cont [8/16] 0.0, 128
  %598 = vxpose.xlu0.b32.cont [9/16] 0.0, 128
  %599 = vxpose.xlu0.b32.cont [10/16] 0.0, 128
  %600 = vxpose.xlu0.b32.cont [11/16] 0.0, 128
  %601 = vxpose.xlu0.b32.cont [12/16] 0.0, 128
  %602 = vxpose.xlu0.b32.cont [13/16] 0.0, 128
  %603 = vxpose.xlu0.b32.cont [14/16] 0.0, 128
  %604 = vxpose.xlu0.b32.cont [15/16] 0.0, 128
  %605 = vxpose.xlu0.b32.end [16/16] 0.0, 128
  %v606 = vpop.trf.xlu0
  %v607 = vpop.trf.xlu0
  %v608 = vpop.trf.xlu0
  %v609 = vpop.trf.xlu0
  %v610 = vpop.trf.xlu0
  %v611 = vpop.trf.xlu0
  %v612 = vpop.trf.xlu0
  %v613 = vpop.trf.xlu0
  %v614 = vpop.trf.xlu0
  %v615 = vpop.trf.xlu0
  %v616 = vpop.trf.xlu0
  %v617 = vpop.trf.xlu0
  %v618 = vpop.trf.xlu0
  %v619 = vpop.trf.xlu0
  %v620 = vpop.trf.xlu0
  %v621 = vpop.trf.xlu0
  %v622 = vlaneseq
  %v623 = vshrl.u32 %v622, 7
  %v624 = vsub.s32 0, %v623
  %v625 = vrot.slane %v606, %v624
  %627 = vbcast.lane.b32.xlu0 %v625, 256
  %v628 = vpop.permute.xlu0 %627
  %s630 = sor.u32 256, 8
  %631 = vbcast.lane.b32.xlu0 %v625, %s630
  %v632 = vpop.permute.xlu0 %631
  %v633 = vlaneseq
  %v634 = vshrl.u32 %v633, 7
  %v635 = vsub.s32 1, %v634
  %v636 = vrot.slane %v606, %v635
  %638 = vbcast.lane.b32.xlu0 %v636, 256
  %v639 = vpop.permute.xlu0 %638
  %s641 = sor.u32 256, 8
  %642 = vbcast.lane.b32.xlu0 %v636, %s641
  %v643 = vpop.permute.xlu0 %642
  %644 = vrot.lane.b32.xlu0 %v574, 110
  %v645 = vpop.permute.xlu0 %644
  %646 = vrot.lane.b32.xlu0 %v579, 110
  %v647 = vpop.permute.xlu0 %646
  %650 = vxpose.xlu0.b32.start [1/16] %v645, 128
  %651 = vxpose.xlu0.b32.cont [2/16] %v647, 128
  %652 = vxpose.xlu0.b32.cont [3/16] 0.0, 128
  %653 = vxpose.xlu0.b32.cont [4/16] 0.0, 128
  %654 = vxpose.xlu0.b32.cont [5/16] 0.0, 128
  %655 = vxpose.xlu0.b32.cont [6/16] 0.0, 128
  %656 = vxpose.xlu0.b32.cont [7/16] 0.0, 128
  %657 = vxpose.xlu0.b32.cont [8/16] 0.0, 128
  %658 = vxpose.xlu0.b32.cont [9/16] 0.0, 128
  %659 = vxpose.xlu0.b32.cont [10/16] 0.0, 128
  %660 = vxpose.xlu0.b32.cont [11/16] 0.0, 128
  %661 = vxpose.xlu0.b32.cont [12/16] 0.0, 128
  %662 = vxpose.xlu0.b32.cont [13/16] 0.0, 128
  %663 = vxpose.xlu0.b32.cont [14/16] 0.0, 128
  %664 = vxpose.xlu0.b32.cont [15/16] 0.0, 128
  %665 = vxpose.xlu0.b32.end [16/16] 0.0, 128
  %v666 = vpop.trf.xlu0
  %v667 = vpop.trf.xlu0
  %v668 = vpop.trf.xlu0
  %v669 = vpop.trf.xlu0
  %v670 = vpop.trf.xlu0
  %v671 = vpop.trf.xlu0
  %v672 = vpop.trf.xlu0
  %v673 = vpop.trf.xlu0
  %v674 = vpop.trf.xlu0
  %v675 = vpop.trf.xlu0
  %v676 = vpop.trf.xlu0
  %v677 = vpop.trf.xlu0
  %v678 = vpop.trf.xlu0
  %v679 = vpop.trf.xlu0
  %v680 = vpop.trf.xlu0
  %v681 = vpop.trf.xlu0
  %v684 = vunpack.c.l.s4 1966171168
  %v685 = vunpack.c.0.s8 %v684
  %v686 = vlaneseq
  %v687 = vshrl.u32 %v686, 7
  %v688 = vsub.s32 %v685, %v687
  %v689 = vrot.slane %v666, %v688
  %v690 = vcombine.high %v689, %v689
  %v692 = vunpack.c.l.s4 1966171168
  %v693 = vunpack.c.0.s8 %v692
  %v694 = vlaneseq
  %v695 = vshrl.u32 %v694, 7
  %v696 = vsub.s32 %v693, %v695
  %v697 = vrot.slane %v689, %v696
  %v699 = vunpack.c.l.s4 1966171168
  %v700 = vunpack.c.0.s8 %v699
  %v701 = vlaneseq
  %v702 = vshrl.u32 %v701, 7
  %v703 = vsub.s32 %v700, %v702
  %v704 = vrot.slane %v690, %v703
  %v705 = vlaneseq
  %v706 = vshrl.u32 %v705, 7
  %v707 = vsub.s32 0, %v706
  %v708 = vrot.slane %v697, %v707
  %v709 = vlaneseq
  %v710 = vshrl.u32 %v709, 7
  %v711 = vsub.s32 0, %v710
  %v712 = vrot.slane %v704, %v711
  %v715 = vadd.f32 %v628, %v708
  %v716 = vadd.f32 %v632, %v708
  %v717 = vadd.f32 %v639, %v712
  %v718 = vadd.f32 %v643, %v712
  %vm719 = vcmp.gt.f32.partialorder %v715, 0.0
  %vm720 = vcmp.gt.f32.partialorder %v716, 0.0
  %vm721 = vcmp.gt.f32.partialorder %v717, 0.0
  %vm722 = vcmp.gt.f32.partialorder %v718, 0.0
  %v723 = vmul.f32 %v715, 0.2
  %v724 = vmul.f32 %v716, 0.2
  %v725 = vmul.f32 %v717, 0.2
  %v726 = vmul.f32 %v718, 0.2
  %v727 = vsel %vm719, %v715, %v723
  %v728 = vsel %vm720, %v716, %v724
  %v729 = vsel %vm721, %v717, %v725
  %v730 = vsel %vm722, %v718, %v726
  %v731 = vadd.f32 %v727, %v20
  %v732 = vadd.f32 %v728, %v21
  %v733 = vadd.f32 %v729, %v20
  %v734 = vadd.f32 %v730, %v21
  %v735 = vsel %vm261, %v731, -inf
  %736 = vmax.xlane.f32.xlu0 %v735
  %v737 = vpop.xlane.xlu0 %736
  %v738 = vsel %vm261, %v732, -inf
  %739 = vmax.xlane.f32.xlu0 %v738
  %v740 = vpop.xlane.xlu0 %739
  %v741 = vsel %vm261, %v733, -inf
  %742 = vmax.xlane.f32.xlu0 %v741
  %v743 = vpop.xlane.xlu0 %742
  %v744 = vsel %vm261, %v734, -inf
  %745 = vmax.xlane.f32.xlu0 %v744
  %v746 = vpop.xlane.xlu0 %745
  %v747 = vsub.f32 %v731, %v737
  %v748 = vsub.f32 %v732, %v740
  %v749 = vsub.f32 %v733, %v743
  %v750 = vsub.f32 %v734, %v746
  %v751 = vmul.f32 %v747, 1.442695
  %v752 = vpow.pop %v751
  %v753 = vmul.f32 %v748, 1.442695
  %v754 = vpow.pop %v753
  %v755 = vmul.f32 %v749, 1.442695
  %v756 = vpow.pop %v755
  %v757 = vmul.f32 %v750, 1.442695
  %v758 = vpow.pop %v757
  %v759 = vsel %vm261, %v752, 0.0
  %760 = vadd.xlane.f32.xlu0 %v759
  %v761 = vpop.xlane.xlu0 %760
  %v762 = vsel %vm261, %v754, 0.0
  %763 = vadd.xlane.f32.xlu0 %v762
  %v764 = vpop.xlane.xlu0 %763
  %v765 = vsel %vm261, %v756, 0.0
  %766 = vadd.xlane.f32.xlu0 %v765
  %v767 = vpop.xlane.xlu0 %766
  %v768 = vsel %vm261, %v758, 0.0
  %769 = vadd.xlane.f32.xlu0 %v768
  %v770 = vpop.xlane.xlu0 %769
  %v771 = vrcp.pop %v761
  %v772 = vrcp.pop %v764
  %v773 = vrcp.pop %v767
  %v774 = vrcp.pop %v770
  %v775 = vmul.f32 %v752, %v771
  %v776 = vmul.f32 %v754, %v772
  %v777 = vmul.f32 %v756, %v773
  %v778 = vmul.f32 %v758, %v774
  %v780 = vsel %vm261, %v775, 0
  %v783 = vsel %vm261, %v776, 0
  %785 = vmatprep.subr.mxu0 0.0
  %786 = vmatpush1.msra.mxu0 %v574
  %787 = vmatprep.subr.mxu0 0.0
  %788 = vmatpush1.msra.mxu0 %v579
  %789 = vmatprep.subr.mxu0 0.0
  %790 = vmatpush1.msra.mxu0 0.0
  %791 = vmatprep.subr.mxu0 0.0
  %792 = vmatpush1.msra.mxu0 0.0
  %793 = vmatprep.subr.mxu0 0.0
  %794 = vmatpush1.msra.mxu0 0.0
  %795 = vmatprep.subr.mxu0 0.0
  %796 = vmatpush1.msra.mxu0 0.0
  %797 = vmatprep.subr.mxu0 0.0
  %798 = vmatpush1.msra.mxu0 0.0
  %799 = vmatprep.subr.mxu0 0.0
  %800 = vmatpush1.msra.mxu0 0.0
  %801 = vmatprep.subr.mxu0 0.0
  %802 = vmatpush1.msra.mxu0 0.0
  %803 = vmatprep.subr.mxu0 0.0
  %804 = vmatpush1.msra.mxu0 0.0
  %805 = vmatprep.subr.mxu0 0.0
  %806 = vmatpush1.msra.mxu0 0.0
  %807 = vmatprep.subr.mxu0 0.0
  %808 = vmatpush1.msra.mxu0 0.0
  %809 = vmatprep.subr.mxu0 0.0
  %810 = vmatpush1.msra.mxu0 0.0
  %811 = vmatprep.subr.mxu0 0.0
  %812 = vmatpush1.msra.mxu0 0.0
  %813 = vmatprep.subr.mxu0 0.0
  %814 = vmatpush1.msra.mxu0 0.0
  %815 = vmatprep.subr.mxu0 0.0
  %816 = vmatpush1.msra.mxu0 0.0
  %817 = vmatprep.subr.mxu0 0.0
  %818 = vmatpush1.msra.mxu0 0.0
  %819 = vmatprep.subr.mxu0 0.0
  %820 = vmatpush1.msra.mxu0 0.0
  %821 = vmatprep.subr.mxu0 0.0
  %822 = vmatpush1.msra.mxu0 0.0
  %823 = vmatprep.subr.mxu0 0.0
  %824 = vmatpush1.msra.mxu0 0.0
  %825 = vmatprep.subr.mxu0 0.0
  %826 = vmatpush1.msra.mxu0 0.0
  %827 = vmatprep.subr.mxu0 0.0
  %828 = vmatpush1.msra.mxu0 0.0
  %829 = vmatprep.subr.mxu0 0.0
  %830 = vmatpush1.msra.mxu0 0.0
  %831 = vmatprep.subr.mxu0 0.0
  %832 = vmatpush1.msra.mxu0 0.0
  %833 = vmatprep.subr.mxu0 0.0
  %834 = vmatpush1.msra.mxu0 0.0
  %835 = vmatprep.subr.mxu0 0.0
  %836 = vmatpush1.msra.mxu0 0.0
  %837 = vmatprep.subr.mxu0 0.0
  %838 = vmatpush1.msra.mxu0 0.0
  %839 = vmatprep.subr.mxu0 0.0
  %840 = vmatpush1.msra.mxu0 0.0
  %841 = vmatprep.subr.mxu0 0.0
  %842 = vmatpush1.msra.mxu0 0.0
  %843 = vmatprep.subr.mxu0 0.0
  %844 = vmatpush1.msra.mxu0 0.0
  %845 = vmatprep.subr.mxu0 0.0
  %846 = vmatpush1.msra.mxu0 0.0
  %847 = vmatprep.subr.mxu0 0.0
  %848 = vmatpush1.msra.mxu0 0.0
  %849 = vmatprep.mubr.f32.mxu0 0.0
  %850 = vmatmul.mubr.f32.gmra.mrb[0].mxu0 %v780
  %v851 = vpop.f32.mrb[0].mxu0
  %v852 = vadd.f32 0.0, %v851
  %v853 = vpop.f32.mrb[0].mxu0
  %854 = vmatprep.mubr.f32.mxu0 0.0
  %855 = vmatmul.mubr.f32.gmra.mrb[0].mxu0 %v783
  %v856 = vpop.f32.mrb[0].mxu0
  %v857 = vadd.f32 0.0, %v856
  %v858 = vpop.f32.mrb[0].mxu0
  %859 = vdwg.mxu0
  %860 = vrot.lane.b32.xlu0 %v574, 120
  %v861 = vpop.permute.xlu0 %860
  %862 = vrot.lane.b32.xlu0 %v579, 120
  %v863 = vpop.permute.xlu0 %862
  %v867 = vsel %vm261, %v777, 0
  %v870 = vsel %vm261, %v778, 0
  %872 = vmatprep.subr.mxu0 0.0
  %873 = vmatpush1.msra.mxu0 %v861
  %874 = vmatprep.subr.mxu0 0.0
  %875 = vmatpush1.msra.mxu0 %v863
  %876 = vmatprep.subr.mxu0 0.0
  %877 = vmatpush1.msra.mxu0 0.0
  %878 = vmatprep.subr.mxu0 0.0
  %879 = vmatpush1.msra.mxu0 0.0
  %880 = vmatprep.subr.mxu0 0.0
  %881 = vmatpush1.msra.mxu0 0.0
  %882 = vmatprep.subr.mxu0 0.0
  %883 = vmatpush1.msra.mxu0 0.0
  %884 = vmatprep.subr.mxu0 0.0
  %885 = vmatpush1.msra.mxu0 0.0
  %886 = vmatprep.subr.mxu0 0.0
  %887 = vmatpush1.msra.mxu0 0.0
  %888 = vmatprep.subr.mxu0 0.0
  %889 = vmatpush1.msra.mxu0 0.0
  %890 = vmatprep.subr.mxu0 0.0
  %891 = vmatpush1.msra.mxu0 0.0
  %892 = vmatprep.subr.mxu0 0.0
  %893 = vmatpush1.msra.mxu0 0.0
  %894 = vmatprep.subr.mxu0 0.0
  %895 = vmatpush1.msra.mxu0 0.0
  %896 = vmatprep.subr.mxu0 0.0
  %897 = vmatpush1.msra.mxu0 0.0
  %898 = vmatprep.subr.mxu0 0.0
  %899 = vmatpush1.msra.mxu0 0.0
  %900 = vmatprep.subr.mxu0 0.0
  %901 = vmatpush1.msra.mxu0 0.0
  %902 = vmatprep.subr.mxu0 0.0
  %903 = vmatpush1.msra.mxu0 0.0
  %904 = vmatprep.subr.mxu0 0.0
  %905 = vmatpush1.msra.mxu0 0.0
  %906 = vmatprep.subr.mxu0 0.0
  %907 = vmatpush1.msra.mxu0 0.0
  %908 = vmatprep.subr.mxu0 0.0
  %909 = vmatpush1.msra.mxu0 0.0
  %910 = vmatprep.subr.mxu0 0.0
  %911 = vmatpush1.msra.mxu0 0.0
  %912 = vmatprep.subr.mxu0 0.0
  %913 = vmatpush1.msra.mxu0 0.0
  %914 = vmatprep.subr.mxu0 0.0
  %915 = vmatpush1.msra.mxu0 0.0
  %916 = vmatprep.subr.mxu0 0.0
  %917 = vmatpush1.msra.mxu0 0.0
  %918 = vmatprep.subr.mxu0 0.0
  %919 = vmatpush1.msra.mxu0 0.0
  %920 = vmatprep.subr.mxu0 0.0
  %921 = vmatpush1.msra.mxu0 0.0
  %922 = vmatprep.subr.mxu0 0.0
  %923 = vmatpush1.msra.mxu0 0.0
  %924 = vmatprep.subr.mxu0 0.0
  %925 = vmatpush1.msra.mxu0 0.0
  %926 = vmatprep.subr.mxu0 0.0
  %927 = vmatpush1.msra.mxu0 0.0
  %928 = vmatprep.subr.mxu0 0.0
  %929 = vmatpush1.msra.mxu0 0.0
  %930 = vmatprep.subr.mxu0 0.0
  %931 = vmatpush1.msra.mxu0 0.0
  %932 = vmatprep.subr.mxu0 0.0
  %933 = vmatpush1.msra.mxu0 0.0
  %934 = vmatprep.subr.mxu0 0.0
  %935 = vmatpush1.msra.mxu0 0.0
  %936 = vmatprep.mubr.f32.mxu0 0.0
  %937 = vmatmul.mubr.f32.gmra.mrb[0].mxu0 %v867
  %v938 = vpop.f32.mrb[0].mxu0
  %v939 = vadd.f32 0.0, %v938
  %v940 = vpop.f32.mrb[0].mxu0
  %941 = vmatprep.mubr.f32.mxu0 0.0
  %942 = vmatmul.mubr.f32.gmra.mrb[0].mxu0 %v870
  %v943 = vpop.f32.mrb[0].mxu0
  %v944 = vadd.f32 0.0, %v943
  %v945 = vpop.f32.mrb[0].mxu0
  %946 = vdwg.mxu0
  %949 = vrot.lane.b32.xlu0 %v939, 8
  %v950 = vpop.permute.xlu0 %949
  %951 = vrot.lane.b32.xlu0 %v944, 8
  %v952 = vpop.permute.xlu0 %951
  %v955 = vsel %vm26, %v852, %v950
  %v956 = vsel %vm26, %v857, %v952
  %v957 = vlaneseq
  %v958 = vshrl.u32 %v957, 7
  %v959 = vsub.s32 0, %v958
  %v960 = vrot.slane %v500, %v959
  %v961 = vmul.f32 %v955, %v960
  %v962 = vmul.f32 %v956, %v960
  %v963 = vlaneseq
  %v964 = vshrl.u32 %v963, 7
  %v965 = vsub.s32 1, %v964
  %v966 = vrot.slane %v500, %v965
  %v967 = vadd.f32 %v961, %v966
  %v968 = vadd.f32 %v962, %v966
  %v969 = vmax.f32 %v967, 0.0
  %v970 = vmax.f32 %v968, 0.0
  %v971 = vld [vmem:[%s4] sm:$0xff]
  %v972 = vld [vmem:[%s4 + $0x8] sm:$0xff]
  %v973 = vld [vmem:[%s4 + $0x10] sm:$0x3]
  %v975 = vsel %vm261, %v969, 0
  %v978 = vsel %vm261, %v970, 0
  %980 = vmatprep.subr.mxu0 0.0
  %981 = vmatpush1.msra.mxu0 %v971
  %982 = vmatprep.subr.mxu0 0.0
  %983 = vmatpush1.msra.mxu0 %v972
  %984 = vmatprep.subr.mxu0 0.0
  %985 = vmatpush1.msra.mxu0 0.0
  %986 = vmatprep.subr.mxu0 0.0
  %987 = vmatpush1.msra.mxu0 0.0
  %988 = vmatprep.subr.mxu0 0.0
  %989 = vmatpush1.msra.mxu0 0.0
  %990 = vmatprep.subr.mxu0 0.0
  %991 = vmatpush1.msra.mxu0 0.0
  %992 = vmatprep.subr.mxu0 0.0
  %993 = vmatpush1.msra.mxu0 0.0
  %994 = vmatprep.subr.mxu0 0.0
  %995 = vmatpush1.msra.mxu0 0.0
  %996 = vmatprep.subr.mxu0 0.0
  %997 = vmatpush1.msra.mxu0 0.0
  %998 = vmatprep.subr.mxu0 0.0
  %999 = vmatpush1.msra.mxu0 0.0
  %1000 = vmatprep.subr.mxu0 0.0
  %1001 = vmatpush1.msra.mxu0 0.0
  %1002 = vmatprep.subr.mxu0 0.0
  %1003 = vmatpush1.msra.mxu0 0.0
  %1004 = vmatprep.subr.mxu0 0.0
  %1005 = vmatpush1.msra.mxu0 0.0
  %1006 = vmatprep.subr.mxu0 0.0
  %1007 = vmatpush1.msra.mxu0 0.0
  %1008 = vmatprep.subr.mxu0 0.0
  %1009 = vmatpush1.msra.mxu0 0.0
  %1010 = vmatprep.subr.mxu0 0.0
  %1011 = vmatpush1.msra.mxu0 0.0
  %1012 = vmatprep.subr.mxu0 0.0
  %1013 = vmatpush1.msra.mxu0 0.0
  %1014 = vmatprep.subr.mxu0 0.0
  %1015 = vmatpush1.msra.mxu0 0.0
  %1016 = vmatprep.subr.mxu0 0.0
  %1017 = vmatpush1.msra.mxu0 0.0
  %1018 = vmatprep.subr.mxu0 0.0
  %1019 = vmatpush1.msra.mxu0 0.0
  %1020 = vmatprep.subr.mxu0 0.0
  %1021 = vmatpush1.msra.mxu0 0.0
  %1022 = vmatprep.subr.mxu0 0.0
  %1023 = vmatpush1.msra.mxu0 0.0
  %1024 = vmatprep.subr.mxu0 0.0
  %1025 = vmatpush1.msra.mxu0 0.0
  %1026 = vmatprep.subr.mxu0 0.0
  %1027 = vmatpush1.msra.mxu0 0.0
  %1028 = vmatprep.subr.mxu0 0.0
  %1029 = vmatpush1.msra.mxu0 0.0
  %1030 = vmatprep.subr.mxu0 0.0
  %1031 = vmatpush1.msra.mxu0 0.0
  %1032 = vmatprep.subr.mxu0 0.0
  %1033 = vmatpush1.msra.mxu0 0.0
  %1034 = vmatprep.subr.mxu0 0.0
  %1035 = vmatpush1.msra.mxu0 0.0
  %1036 = vmatprep.subr.mxu0 0.0
  %1037 = vmatpush1.msra.mxu0 0.0
  %1038 = vmatprep.subr.mxu0 0.0
  %1039 = vmatpush1.msra.mxu0 0.0
  %1040 = vmatprep.subr.mxu0 0.0
  %1041 = vmatpush1.msra.mxu0 0.0
  %1042 = vmatprep.subr.mxu0 0.0
  %1043 = vmatpush1.msra.mxu0 0.0
  %1044 = vmatprep.mubr.f32.mxu0 0.0
  %1045 = vmatmul.mubr.f32.gmra.mrb[0].mxu0 %v975
  %v1046 = vpop.f32.mrb[0].mxu0
  %v1047 = vadd.f32 0.0, %v1046
  %v1048 = vpop.f32.mrb[0].mxu0
  %1049 = vmatprep.mubr.f32.mxu0 0.0
  %1050 = vmatmul.mubr.f32.gmra.mrb[0].mxu0 %v978
  %v1051 = vpop.f32.mrb[0].mxu0
  %v1052 = vadd.f32 0.0, %v1051
  %v1053 = vpop.f32.mrb[0].mxu0
  %1054 = vdwg.mxu0
  %1057 = vrot.lane.b32.xlu0 %v1047, 124
  %v1058 = vpop.permute.xlu0 %1057
  %1059 = vrot.lane.b32.xlu0 %v1052, 124
  %v1060 = vpop.permute.xlu0 %1059
  %1063 = vxpose.xlu0.b32.start [1/16] %v1058, 128
  %1064 = vxpose.xlu0.b32.cont [2/16] %v1060, 128
  %1065 = vxpose.xlu0.b32.cont [3/16] 0.0, 128
  %1066 = vxpose.xlu0.b32.cont [4/16] 0.0, 128
  %1067 = vxpose.xlu0.b32.cont [5/16] 0.0, 128
  %1068 = vxpose.xlu0.b32.cont [6/16] 0.0, 128
  %1069 = vxpose.xlu0.b32.cont [7/16] 0.0, 128
  %1070 = vxpose.xlu0.b32.cont [8/16] 0.0, 128
  %1071 = vxpose.xlu0.b32.cont [9/16] 0.0, 128
  %1072 = vxpose.xlu0.b32.cont [10/16] 0.0, 128
  %1073 = vxpose.xlu0.b32.cont [11/16] 0.0, 128
  %1074 = vxpose.xlu0.b32.cont [12/16] 0.0, 128
  %1075 = vxpose.xlu0.b32.cont [13/16] 0.0, 128
  %1076 = vxpose.xlu0.b32.cont [14/16] 0.0, 128
  %1077 = vxpose.xlu0.b32.cont [15/16] 0.0, 128
  %1078 = vxpose.xlu0.b32.end [16/16] 0.0, 128
  %v1079 = vpop.trf.xlu0
  %v1080 = vpop.trf.xlu0
  %v1081 = vpop.trf.xlu0
  %v1082 = vpop.trf.xlu0
  %v1083 = vpop.trf.xlu0
  %v1084 = vpop.trf.xlu0
  %v1085 = vpop.trf.xlu0
  %v1086 = vpop.trf.xlu0
  %v1087 = vpop.trf.xlu0
  %v1088 = vpop.trf.xlu0
  %v1089 = vpop.trf.xlu0
  %v1090 = vpop.trf.xlu0
  %v1091 = vpop.trf.xlu0
  %v1092 = vpop.trf.xlu0
  %v1093 = vpop.trf.xlu0
  %v1094 = vpop.trf.xlu0
  %v1095 = vlaneseq
  %v1096 = vshrl.u32 %v1095, 7
  %v1097 = vsub.s32 0, %v1096
  %v1098 = vrot.slane %v1079, %v1097
  %1100 = vbcast.lane.b32.xlu0 %v1098, 256
  %v1101 = vpop.permute.xlu0 %1100
  %s1103 = sor.u32 256, 8
  %1104 = vbcast.lane.b32.xlu0 %v1098, %s1103
  %v1105 = vpop.permute.xlu0 %1104
  %1106 = vrot.lane.b32.xlu0 %v1047, 123
  %v1107 = vpop.permute.xlu0 %1106
  %1108 = vrot.lane.b32.xlu0 %v1052, 123
  %v1109 = vpop.permute.xlu0 %1108
  %1112 = vxpose.xlu0.b32.start [1/16] %v1107, 128
  %1113 = vxpose.xlu0.b32.cont [2/16] %v1109, 128
  %1114 = vxpose.xlu0.b32.cont [3/16] 0.0, 128
  %1115 = vxpose.xlu0.b32.cont [4/16] 0.0, 128
  %1116 = vxpose.xlu0.b32.cont [5/16] 0.0, 128
  %1117 = vxpose.xlu0.b32.cont [6/16] 0.0, 128
  %1118 = vxpose.xlu0.b32.cont [7/16] 0.0, 128
  %1119 = vxpose.xlu0.b32.cont [8/16] 0.0, 128
  %1120 = vxpose.xlu0.b32.cont [9/16] 0.0, 128
  %1121 = vxpose.xlu0.b32.cont [10/16] 0.0, 128
  %1122 = vxpose.xlu0.b32.cont [11/16] 0.0, 128
  %1123 = vxpose.xlu0.b32.cont [12/16] 0.0, 128
  %1124 = vxpose.xlu0.b32.cont [13/16] 0.0, 128
  %1125 = vxpose.xlu0.b32.cont [14/16] 0.0, 128
  %1126 = vxpose.xlu0.b32.cont [15/16] 0.0, 128
  %1127 = vxpose.xlu0.b32.end [16/16] 0.0, 128
  %v1128 = vpop.trf.xlu0
  %v1129 = vpop.trf.xlu0
  %v1130 = vpop.trf.xlu0
  %v1131 = vpop.trf.xlu0
  %v1132 = vpop.trf.xlu0
  %v1133 = vpop.trf.xlu0
  %v1134 = vpop.trf.xlu0
  %v1135 = vpop.trf.xlu0
  %v1136 = vpop.trf.xlu0
  %v1137 = vpop.trf.xlu0
  %v1138 = vpop.trf.xlu0
  %v1139 = vpop.trf.xlu0
  %v1140 = vpop.trf.xlu0
  %v1141 = vpop.trf.xlu0
  %v1142 = vpop.trf.xlu0
  %v1143 = vpop.trf.xlu0
  %v1144 = vlaneseq
  %v1145 = vshrl.u32 %v1144, 7
  %v1146 = vsub.s32 0, %v1145
  %v1147 = vrot.slane %v1128, %v1146
  %v1148 = vadd.f32 %v1101, %v1147
  %v1149 = vadd.f32 %v1105, %v1147
  %vm1150 = vcmp.gt.f32.partialorder %v1148, 0.0
  %vm1151 = vcmp.gt.f32.partialorder %v1149, 0.0
  %v1152 = vmul.f32 %v1148, 0.2
  %v1153 = vmul.f32 %v1149, 0.2
  %v1154 = vsel %vm1150, %v1148, %v1152
  %v1155 = vsel %vm1151, %v1149, %v1153
  %v1156 = vadd.f32 %v1154, %v20
  %v1157 = vadd.f32 %v1155, %v21
  %v1158 = vsel %vm261, %v1156, -inf
  %1159 = vmax.xlane.f32.xlu0 %v1158
  %v1160 = vpop.xlane.xlu0 %1159
  %v1161 = vsel %vm261, %v1157, -inf
  %1162 = vmax.xlane.f32.xlu0 %v1161
  %v1163 = vpop.xlane.xlu0 %1162
  %v1164 = vsub.f32 %v1156, %v1160
  %v1165 = vsub.f32 %v1157, %v1163
  %v1166 = vmul.f32 %v1164, 1.442695
  %v1167 = vpow.pop %v1166
  %v1168 = vmul.f32 %v1165, 1.442695
  %v1169 = vpow.pop %v1168
  %v1170 = vsel %vm261, %v1167, 0.0
  %1171 = vadd.xlane.f32.xlu0 %v1170
  %v1172 = vpop.xlane.xlu0 %1171
  %v1173 = vsel %vm261, %v1169, 0.0
  %1174 = vadd.xlane.f32.xlu0 %v1173
  %v1175 = vpop.xlane.xlu0 %1174
  %v1176 = vrcp.pop %v1172
  %v1177 = vrcp.pop %v1175
  %v1178 = vmul.f32 %v1167, %v1176
  %v1179 = vmul.f32 %v1169, %v1177
  %v1181 = vsel %vm261, %v1178, 0
  %v1184 = vsel %vm261, %v1179, 0
  %1186 = vmatprep.subr.mxu0 0.0
  %1187 = vmatpush1.msra.mxu0 %v1047
  %1188 = vmatprep.subr.mxu0 0.0
  %1189 = vmatpush1.msra.mxu0 %v1052
  %1190 = vmatprep.subr.mxu0 0.0
  %1191 = vmatpush1.msra.mxu0 0.0
  %1192 = vmatprep.subr.mxu0 0.0
  %1193 = vmatpush1.msra.mxu0 0.0
  %1194 = vmatprep.subr.mxu0 0.0
  %1195 = vmatpush1.msra.mxu0 0.0
  %1196 = vmatprep.subr.mxu0 0.0
  %1197 = vmatpush1.msra.mxu0 0.0
  %1198 = vmatprep.subr.mxu0 0.0
  %1199 = vmatpush1.msra.mxu0 0.0
  %1200 = vmatprep.subr.mxu0 0.0
  %1201 = vmatpush1.msra.mxu0 0.0
  %1202 = vmatprep.subr.mxu0 0.0
  %1203 = vmatpush1.msra.mxu0 0.0
  %1204 = vmatprep.subr.mxu0 0.0
  %1205 = vmatpush1.msra.mxu0 0.0
  %1206 = vmatprep.subr.mxu0 0.0
  %1207 = vmatpush1.msra.mxu0 0.0
  %1208 = vmatprep.subr.mxu0 0.0
  %1209 = vmatpush1.msra.mxu0 0.0
  %1210 = vmatprep.subr.mxu0 0.0
  %1211 = vmatpush1.msra.mxu0 0.0
  %1212 = vmatprep.subr.mxu0 0.0
  %1213 = vmatpush1.msra.mxu0 0.0
  %1214 = vmatprep.subr.mxu0 0.0
  %1215 = vmatpush1.msra.mxu0 0.0
  %1216 = vmatprep.subr.mxu0 0.0
  %1217 = vmatpush1.msra.mxu0 0.0
  %1218 = vmatprep.subr.mxu0 0.0
  %1219 = vmatpush1.msra.mxu0 0.0
  %1220 = vmatprep.subr.mxu0 0.0
  %1221 = vmatpush1.msra.mxu0 0.0
  %1222 = vmatprep.subr.mxu0 0.0
  %1223 = vmatpush1.msra.mxu0 0.0
  %1224 = vmatprep.subr.mxu0 0.0
  %1225 = vmatpush1.msra.mxu0 0.0
  %1226 = vmatprep.subr.mxu0 0.0
  %1227 = vmatpush1.msra.mxu0 0.0
  %1228 = vmatprep.subr.mxu0 0.0
  %1229 = vmatpush1.msra.mxu0 0.0
  %1230 = vmatprep.subr.mxu0 0.0
  %1231 = vmatpush1.msra.mxu0 0.0
  %1232 = vmatprep.subr.mxu0 0.0
  %1233 = vmatpush1.msra.mxu0 0.0
  %1234 = vmatprep.subr.mxu0 0.0
  %1235 = vmatpush1.msra.mxu0 0.0
  %1236 = vmatprep.subr.mxu0 0.0
  %1237 = vmatpush1.msra.mxu0 0.0
  %1238 = vmatprep.subr.mxu0 0.0
  %1239 = vmatpush1.msra.mxu0 0.0
  %1240 = vmatprep.subr.mxu0 0.0
  %1241 = vmatpush1.msra.mxu0 0.0
  %1242 = vmatprep.subr.mxu0 0.0
  %1243 = vmatpush1.msra.mxu0 0.0
  %1244 = vmatprep.subr.mxu0 0.0
  %1245 = vmatpush1.msra.mxu0 0.0
  %1246 = vmatprep.subr.mxu0 0.0
  %1247 = vmatpush1.msra.mxu0 0.0
  %1248 = vmatprep.subr.mxu0 0.0
  %1249 = vmatpush1.msra.mxu0 0.0
  %1250 = vmatprep.mubr.f32.mxu0 0.0
  %1251 = vmatmul.mubr.f32.gmra.mrb[0].mxu0 %v1181
  %v1252 = vpop.f32.mrb[0].mxu0
  %v1253 = vadd.f32 0.0, %v1252
  %v1254 = vpop.f32.mrb[0].mxu0
  %1255 = vmatprep.mubr.f32.mxu0 0.0
  %1256 = vmatmul.mubr.f32.gmra.mrb[0].mxu0 %v1184
  %v1257 = vpop.f32.mrb[0].mxu0
  %v1258 = vadd.f32 0.0, %v1257
  %v1259 = vpop.f32.mrb[0].mxu0
  %1260 = vdwg.mxu0
  %v1261 = vlaneseq
  %v1262 = vshrl.u32 %v1261, 7
  %v1263 = vsub.s32 0, %v1262
  %v1264 = vrot.slane %v973, %v1263
  %v1265 = vmul.f32 %v1253, %v1264
  %v1266 = vmul.f32 %v1258, %v1264
  %v1267 = vlaneseq
  %v1268 = vshrl.u32 %v1267, 7
  %v1269 = vsub.s32 1, %v1268
  %v1270 = vrot.slane %v973, %v1269
  %v1271 = vadd.f32 %v1265, %v1270
  %v1272 = vadd.f32 %v1266, %v1270
  %v1273 = vmax.f32 %v1271, 0.0
  %v1274 = vmax.f32 %v1272, 0.0
  %vm1275 = vcmask 31744
  %1276 = vst.msk [vmem:[%s5] sm:$0xff] %vm1275, %v1273
  %1277 = vst.msk [vmem:[%s5 + $0x8] sm:$0xff] %vm1275, %v1274
  // Predicated region
  $region22: #{tpu_custom_call.1} parent=0 // pred_check
    _
  $region23: #{tpu_custom_call.1} parent=0 // pred_check_branch
    %1279 = sbr.rel (0) target = $region25
  $region24: #{tpu_custom_call.1} parent=0 // pred_region
    _
  $region25: #{tpu_custom_call.1} parent=0 // pred_fallthru
    _
  // Predicated region
  $region26: #{tpu_custom_call.1} parent=0 // pred_check
    _
  $region27: #{tpu_custom_call.1} parent=0 // pred_check_branch
    %1281 = sbr.rel (0) target = $region29
  $region28: #{tpu_custom_call.1} parent=0 // pred_region
    _
  $region29: #{tpu_custom_call.1} parent=0 // pred_fallthru
    _

</llo_original>
